<compile_context>
chip_gen: v6e
topology: v6e:2x2x1
jax: 0.10.0
libtpu: 0.0.40
codegen_flags: <defaults>
</compile_context>

<pallas_src>
import jax
import jax.numpy as jnp
from jax import lax
from jax.experimental import pallas as pl
from jax.experimental.pallas import tpu as pltpu

PAD_IDX = 0

# Small hyper-parameters consistent with the module's __init__ signature.
VOCAB = 32
EMB = 32
LSTM_HIDDEN = 64          # bidirectional -> 32 per direction
HID = LSTM_HIDDEN // 2
G_HIDDEN = 64
FUSION = 64
OUT_PAD = 128             # lane-dense output slab width


def _vmem_specs(n):
    return [pl.BlockSpec(memory_space=pltpu.MemorySpace.VMEM) for _ in range(n)]


def _sigmoid(x):
    # Hand-rolled sigmoid keeps kernel and reference numerically identical.
    return 1.0 / (1.0 + jnp.exp(-x))


# --------------------------------------------------------------------------- #
# Fused kernel: embedding + masked BiLSTM + temporal proj/BN + dense 2-layer
# GCN + mean-pool + graph proj/BN + residual ReLU fusion.
#
# Packed-parameter layout:
#   wih_ref  : (E, 8H)   = [wih_f_t | wih_b_t]
#   whh_ref  : (2H, 4H)  = [whh_f_t ; whh_b_t]
#   proj_ref : (64, 192) = [wt_t | w2_t | wg_t]
#   vecs_ref : (11, 128) rows = b_f, b_b, bt, t_scale, t_shift,
#                               w1_row, b1, b2, bg, g_scale, g_shift (zero-padded)
# --------------------------------------------------------------------------- #
def gt_block_kernel(seq_ref, len_ref, emb_ref, wih_ref, whh_ref,
                    proj_ref, vecs_ref, adj_ref, xn_ref, pool_ref,
                    out_ref):
    TB = seq_ref.shape[0]
    B = len_ref.shape[0]
    T = TB // B
    V = emb_ref.shape[0]
    H = HID
    H4 = 4 * H
    B2 = 2 * B

    # ---- hoisted embedding + input-to-hidden projections (both directions) ----
    ids = seq_ref[...]                                                     # (T*B, 1)
    onehot = (ids == lax.broadcasted_iota(jnp.int32, (TB, V), 1)).astype(jnp.float32)
    x_all = jnp.dot(onehot, emb_ref[...], preferred_element_type=jnp.float32)   # (T*B, E)
    g_all = jnp.dot(x_all, wih_ref[...], preferred_element_type=jnp.float32)    # (T*B, 8H)
    b_f = vecs_ref[0:1, :]                                                 # (1, 4H)
    b_b = vecs_ref[1:2, :]
    g_fwd = g_all[:, 0:H4] + b_f                                           # (T*B, 4H)
    g_bwd = g_all[:, H4:2 * H4] + b_b

    lengths = len_ref[...]                                                 # (B, 1) int32
    whh = whh_ref[...]                                                     # (2H, 4H)

    # direction-select masks for the stacked (2B, H) state (rows 0..B-1 = fwd)
    row = lax.broadcasted_iota(jnp.int32, (B2, 1), 0)
    sel_f = (row < B).astype(jnp.float32)
    sel_b = 1.0 - sel_f

    h = jnp.zeros((B2, H), jnp.float32)
    c = jnp.zeros((B2, H), jnp.float32)

    # Fully-unrolled fused recurrence: fwd rows consume time s, bwd rows T-1-s.
    # Masked updates reproduce pack_padded_sequence semantics: forward final hidden
    # is h at t = len-1; backward final hidden is h at t = 0 after starting the
    # recurrence at t = len-1 (padding steps never update the state).
    for s in range(T):
        tb = T - 1 - s
        gate_in = jnp.concatenate(
            [g_fwd[s * B:(s + 1) * B, :], g_bwd[tb * B:(tb + 1) * B, :]], axis=0)  # (2B, 4H)
        hcat = jnp.concatenate([h * sel_f, h * sel_b], axis=1)                     # (2B, 2H)
        gates = gate_in + jnp.dot(hcat, whh, preferred_element_type=jnp.float32)   # (2B, 4H)
        sg = _sigmoid(gates)                       # one pass over the full gates slab
        i_g = sg[:, 0:H]
        f_g = sg[:, H:2 * H]
        o_g = sg[:, 3 * H:4 * H]
        g_g = jnp.tanh(gates[:, 2 * H:3 * H])
        c_new = f_g * c + i_g * g_g
        h_new = o_g * jnp.tanh(c_new)
        m_f = (s < lengths).astype(jnp.float32)    # (B, 1)
        m_b = (tb < lengths).astype(jnp.float32)
        m = jnp.concatenate([m_f, m_b], axis=0)    # (2B, 1)
        h = m * h_new + (1.0 - m) * h
        c = m * c_new + (1.0 - m) * c

    # torch.cat([h_n[-2], h_n[-1]], dim=1)
    h_final = jnp.concatenate([h[0:B, :], h[B:B2, :]], axis=1)             # (B, 2H)

    # ---- temporal branch: Linear -> BatchNorm1d (eval) -> Dropout (identity) ----
    wt_t = proj_ref[:, 0:FUSION]
    bt = vecs_ref[2:3, 0:FUSION]
    t_scale = vecs_ref[3:4, 0:FUSION]
    t_shift = vecs_ref[4:5, 0:FUSION]
    tx = jnp.dot(h_final, wt_t, preferred_element_type=jnp.float32) + bt
    tx = tx * t_scale + t_shift

    # ---- graph branch: GCNConv = A_norm @ (X @ W^T) + b, ReLU, x2, mean-pool ----
    w1_row = vecs_ref[5:6, 0:G_HIDDEN]
    b1 = vecs_ref[6:7, 0:G_HIDDEN]
    b2 = vecs_ref[7:8, 0:G_HIDDEN]
    bg = vecs_ref[8:9, 0:FUSION]
    g_scale = vecs_ref[9:10, 0:FUSION]
    g_shift = vecs_ref[10:11, 0:FUSION]
    w2_t = proj_ref[:, FUSION:2 * FUSION]
    wg_t = proj_ref[:, 2 * FUSION:3 * FUSION]

    adj = adj_ref[...]
    xw = xn_ref[...] * w1_row                                              # (N,1)*(1,G) -> (N,G)
    g1 = jnp.maximum(jnp.dot(adj, xw, preferred_element_type=jnp.float32) + b1, 0.0)
    g2 = jnp.maximum(
        jnp.dot(adj, jnp.dot(g1, w2_t, preferred_element_type=jnp.float32),
                preferred_element_type=jnp.float32) + b2, 0.0)
    pooled = jnp.dot(pool_ref[...], g2, preferred_element_type=jnp.float32)        # (B, G)
    gx = jnp.dot(pooled, wg_t, preferred_element_type=jnp.float32) + bg
    gx = gx * g_scale + g_shift

    fused = jnp.maximum(gx + tx, 0.0)                                      # (B, FUSION)
    # lane-dense store: pad the 64-wide result to a full 128-lane slab
    pad = jnp.zeros((B, out_ref.shape[1] - FUSION), jnp.float32)
    out_ref[...] = jnp.concatenate([fused, pad], axis=1)


# --------------------------------------------------------------------------- #
# Plain-JAX glue: dense GCN adjacency, pooling matrix (hoisted/cacheable),
# parameter init, packing, wrapper.
# --------------------------------------------------------------------------- #
def build_norm_adj(edge_index, num_nodes):
    src, dst = edge_index
    A = jnp.zeros((num_nodes, num_nodes), jnp.float32)
    A = A.at[dst, src].add(1.0)
    A = A + jnp.eye(num_nodes, dtype=jnp.float32)             # add_self_loops
    deg = A.sum(axis=1)
    dinv = lax.rsqrt(deg)
    return A * dinv[:, None] * dinv[None, :]                  # D^-1/2 (A+I) D^-1/2


def build_pool(batch_vec, num_graphs):
    onehot = (batch_vec[None, :] == jnp.arange(num_graphs)[:, None]).astype(jnp.float32)
    counts = jnp.maximum(onehot.sum(axis=1, keepdims=True), 1.0)
    return onehot / counts                                    # global_mean_pool matrix


def init_params(key):
    ks = jax.random.split(key, 19)

    def u(k, shape, scale=0.1):
        return jax.random.uniform(k, shape, jnp.float32, -1.0, 1.0) * scale

    emb = u(ks[0], (VOCAB, EMB), 0.5).at[PAD_IDX].set(0.0)     # padding_idx row = 0
    wih_f = u(ks[1], (4 * HID, EMB)); whh_f = u(ks[2], (4 * HID, HID))
    b_ih_f = u(ks[3], (4 * HID,));    b_hh_f = u(ks[4], (4 * HID,))
    wih_b = u(ks[5], (4 * HID, EMB)); whh_b = u(ks[6], (4 * HID, HID))
    b_ih_b = u(ks[7], (4 * HID,));    b_hh_b = u(ks[8], (4 * HID,))
    wt = u(ks[9], (FUSION, LSTM_HIDDEN)); bt = u(ks[10], (FUSION,))
    w1 = u(ks[11], (G_HIDDEN, 1));        b1 = u(ks[12], (G_HIDDEN,))
    w2 = u(ks[13], (G_HIDDEN, G_HIDDEN)); b2 = u(ks[14], (G_HIDDEN,))
    wg = u(ks[15], (FUSION, G_HIDDEN));   bg = u(ks[16], (FUSION,))

    def bn(k, dim):
        k1, k2, k3, k4 = jax.random.split(k, 4)
        gamma = 1.0 + u(k1, (dim,))
        beta = u(k2, (dim,))
        mean = u(k3, (dim,))
        var = 1.0 + 0.1 * jax.random.uniform(k4, (dim,), jnp.float32)
        scale = gamma / jnp.sqrt(var + 1e-5)
        shift = beta - mean * scale
        return scale.reshape(1, dim), shift.reshape(1, dim)

    t_scale, t_shift = bn(ks[17], FUSION)
    g_scale, g_shift = bn(ks[18], FUSION)

    return dict(
        emb=emb,
        wih_f_t=wih_f.T, whh_f_t=whh_f.T, b_f=(b_ih_f + b_hh_f).reshape(1, -1),
        wih_b_t=wih_b.T, whh_b_t=whh_b.T, b_b=(b_ih_b + b_hh_b).reshape(1, -1),
        wt_t=wt.T, bt=bt.reshape(1, -1), t_scale=t_scale, t_shift=t_shift,
        w1_row=w1.T, b1=b1.reshape(1, -1), w2_t=w2.T, b2=b2.reshape(1, -1),
        wg_t=wg.T, bg=bg.reshape(1, -1), g_scale=g_scale, g_shift=g_shift,
    )


def pack_params(p):
    """Pack weights into few large VMEM-friendly arrays (fewer tiny DMAs)."""
    wih_cat = jnp.concatenate([p['wih_f_t'], p['wih_b_t']], axis=1)         # (E, 8H)
    whh_cat = jnp.concatenate([p['whh_f_t'], p['whh_b_t']], axis=0)         # (2H, 4H)
    proj_cat = jnp.concatenate([p['wt_t'], p['w2_t'], p['wg_t']], axis=1)   # (64, 192)

    def pad128(v):
        v = v.reshape(1, -1)
        return jnp.pad(v, ((0, 0), (0, 128 - v.shape[1])))

    vecs = jnp.concatenate([
        pad128(p['b_f']), pad128(p['b_b']),
        pad128(p['bt']), pad128(p['t_scale']), pad128(p['t_shift']),
        pad128(p['w1_row']), pad128(p['b1']), pad128(p['b2']),
        pad128(p['bg']), pad128(p['g_scale']), pad128(p['g_shift']),
    ], axis=0)                                                              # (11, 128)

    return dict(emb=p['emb'], wih_cat=wih_cat, whh_cat=whh_cat,
                proj_cat=proj_cat, vecs=vecs)


@jax.jit
def gt_block_forward(seq_bt, lengths, node_x, adj_norm, pool_mat, kp):
    B, T = seq_bt.shape
    # time-major flattened token ids: row index = t*B + b
    seq_tb = jnp.transpose(seq_bt, (1, 0)).reshape(T * B, 1).astype(jnp.int32)
    len_col = lengths.reshape(B, 1).astype(jnp.int32)
    inputs = (seq_tb, len_col, kp['emb'], kp['wih_cat'], kp['whh_cat'],
              kp['proj_cat'], kp['vecs'], adj_norm, node_x, pool_mat)
    out = pl.pallas_call(
        gt_block_kernel,
        out_shape=jax.ShapeDtypeStruct((B, OUT_PAD), jnp.float32),
        in_specs=_vmem_specs(len(inputs)),
        out_specs=pl.BlockSpec(memory_space=pltpu.MemorySpace.VMEM),
    )(*inputs)
    return out[:, :FUSION]


# --------------------------------------------------------------------------- #
# Pure-JAX reference (same math) for a correctness check.
# --------------------------------------------------------------------------- #
def reference_forward(seq_bt, lengths, node_x, adj_norm, pool_mat, p):
    B, T = seq_bt.shape
    x = p['emb'][seq_bt]                                       # (B, T, E)

    def run_dir(wih_t, whh_t, b, reverse):
        h = jnp.zeros((B, HID), jnp.float32)
        c = jnp.zeros((B, HID), jnp.float32)
        ts = range(T - 1, -1, -1) if reverse else range(T)
        for t in ts:
            gates = x[:, t, :] @ wih_t + h @ whh_t + b
            i = _sigmoid(gates[:, :HID]); f = _sigmoid(gates[:, HID:2 * HID])
            g = jnp.tanh(gates[:, 2 * HID:3 * HID]); o = _sigmoid(gates[:, 3 * HID:])
            c_new = f * c + i * g
            h_new = o * jnp.tanh(c_new)
            m = (t < lengths).astype(jnp.float32)[:, None]
            h = m * h_new + (1.0 - m) * h
            c = m * c_new + (1.0 - m) * c
        return h

    h = jnp.concatenate([run_dir(p['wih_f_t'], p['whh_f_t'], p['b_f'], False),
                         run_dir(p['wih_b_t'], p['whh_b_t'], p['b_b'], True)], axis=1)
    tx = (h @ p['wt_t'] + p['bt']) * p['t_scale'] + p['t_shift']

    g1 = jnp.maximum(adj_norm @ (node_x * p['w1_row']) + p['b1'], 0.0)
    g2 = jnp.maximum(adj_norm @ (g1 @ p['w2_t']) + p['b2'], 0.0)
    gx = ((pool_mat @ g2) @ p['wg_t'] + p['bg']) * p['g_scale'] + p['g_shift']
    return jnp.maximum(gx + tx, 0.0)


if __name__ == "__main__":
    key = jax.random.PRNGKey(0)
    k_seq, k_nodes, k_params = jax.random.split(key, 3)

    B, T = 4, 8
    lengths = jnp.array([8, 5, 3, 6], dtype=jnp.int32)
    seq = jax.random.randint(k_seq, (B, T), 1, VOCAB).astype(jnp.int32)
    tmask = jnp.arange(T)[None, :] < lengths[:, None]
    seq = jnp.where(tmask, seq, PAD_IDX)

    # 4 graphs x 4 nodes, ring topology within each graph (both edge directions).
    num_graphs, nodes_per_graph = B, 4
    N = num_graphs * nodes_per_graph
    src_list, dst_list = [], []
    for g in range(num_graphs):
        base = g * nodes_per_graph
        for i in range(nodes_per_graph):
            a, b = base + i, base + (i + 1) % nodes_per_graph
            src_list += [a, b]
            dst_list += [b, a]
    edge_index = jnp.array([src_list, dst_list], dtype=jnp.int32)   # (2, 32)
    batch_vec = jnp.repeat(jnp.arange(num_graphs, dtype=jnp.int32), nodes_per_graph)
    node_x = jax.random.normal(k_nodes, (N, 1), jnp.float32)

    params = init_params(k_params)
    packed = pack_params(params)

    # Static graph topology: build the normalized adjacency and pooling matrix
    # ONCE (hoisted out of the per-forward path) and reuse.
    A_norm = build_norm_adj(edge_index, N)
    P_pool = build_pool(batch_vec, B)

    out = gt_block_forward(seq, lengths, node_x, A_norm, P_pool, packed)
    out = jax.block_until_ready(out)

    ref = reference_forward(seq, lengths, node_x, A_norm, P_pool, params)
    assert out.shape == (B, FUSION)
    assert bool(jnp.all(jnp.isfinite(out)))
    assert bool(jnp.allclose(out, ref, atol=1e-2, rtol=1e-2))

    print("KERNEL_OK")
</pallas_src>

<mosaic_0001>
module attributes {stable_mosaic.version = 11 : i64} {
  func.func @gt_block_kernel(%arg0: memref<32x1xi32, #tpu.memory_space<vmem>>, %arg1: memref<4x1xi32, #tpu.memory_space<vmem>>, %arg2: memref<32x32xf32, #tpu.memory_space<vmem>>, %arg3: memref<32x256xf32, #tpu.memory_space<vmem>>, %arg4: memref<64x128xf32, #tpu.memory_space<vmem>>, %arg5: memref<64x192xf32, #tpu.memory_space<vmem>>, %arg6: memref<11x128xf32, #tpu.memory_space<vmem>>, %arg7: memref<16x16xf32, #tpu.memory_space<vmem>>, %arg8: memref<16x1xf32, #tpu.memory_space<vmem>>, %arg9: memref<4x16xf32, #tpu.memory_space<vmem>>, %arg10: memref<4x128xf32, #tpu.memory_space<vmem>>) attributes {dimension_semantics = [], scalar_prefetch = 0 : i64, scratch_operands = 0 : i64, tpu.core_type = #tpu.core_type<tc>} {
    %c0 = arith.constant 0 : index
    %c0_0 = arith.constant 0 : index
    %0 = vector.load %arg0[%c0, %c0_0] : memref<32x1xi32, #tpu.memory_space<vmem>>, vector<32x1xi32>
    %1 = tpu.iota {dimensions = array<i32: 1>} : vector<32x32xi32>
    %2 = vector.broadcast %0 : vector<32x1xi32> to vector<32x32xi32>
    %3 = arith.cmpi eq, %2, %1 : vector<32x32xi32>
    %4 = arith.extui %3 : vector<32x32xi1> to vector<32x32xi32>
    %5 = arith.sitofp %4 : vector<32x32xi32> to vector<32x32xf32>
    %c0_1 = arith.constant 0 : index
    %c0_2 = arith.constant 0 : index
    %6 = vector.load %arg2[%c0_1, %c0_2] : memref<32x32xf32, #tpu.memory_space<vmem>>, vector<32x32xf32>
    %cst = arith.constant dense<0.000000e+00> : vector<32x32xf32>
    %7 = tpu.matmul %5, %6, %cst {dimension_numbers = #tpu.dot_dimension_numbers<[1], [0], [0], [1], [0, 0, 1, 1], [], []>} : vector<32x32xf32>, vector<32x32xf32>, vector<32x32xf32> -> vector<32x32xf32>
    %c0_3 = arith.constant 0 : index
    %c0_4 = arith.constant 0 : index
    %8 = vector.load %arg3[%c0_3, %c0_4] : memref<32x256xf32, #tpu.memory_space<vmem>>, vector<32x256xf32>
    %cst_5 = arith.constant dense<0.000000e+00> : vector<32x256xf32>
    %9 = tpu.matmul %7, %8, %cst_5 {dimension_numbers = #tpu.dot_dimension_numbers<[1], [0], [0], [1], [0, 0, 1, 1], [], []>} : vector<32x32xf32>, vector<32x256xf32>, vector<32x256xf32> -> vector<32x256xf32>
    %c0_6 = arith.constant 0 : index
    %c0_7 = arith.constant 0 : index
    %10 = vector.load %arg6[%c0_6, %c0_7] : memref<11x128xf32, #tpu.memory_space<vmem>>, vector<1x128xf32>
    %c1 = arith.constant 1 : index
    %c0_8 = arith.constant 0 : index
    %11 = vector.load %arg6[%c1, %c0_8] : memref<11x128xf32, #tpu.memory_space<vmem>>, vector<1x128xf32>
    %12 = vector.extract_strided_slice %9 {offsets = [0, 0], sizes = [32, 128], strides = [1, 1]} : vector<32x256xf32> to vector<32x128xf32>
    %13 = vector.broadcast %10 : vector<1x128xf32> to vector<32x128xf32>
    %14 = arith.addf %12, %13 : vector<32x128xf32>
    %15 = vector.extract_strided_slice %9 {offsets = [0, 128], sizes = [32, 128], strides = [1, 1]} : vector<32x256xf32> to vector<32x128xf32>
    %16 = vector.broadcast %11 : vector<1x128xf32> to vector<32x128xf32>
    %17 = arith.addf %15, %16 : vector<32x128xf32>
    %c0_9 = arith.constant 0 : index
    %c0_10 = arith.constant 0 : index
    %18 = vector.load %arg1[%c0_9, %c0_10] : memref<4x1xi32, #tpu.memory_space<vmem>>, vector<4x1xi32>
    %c0_11 = arith.constant 0 : index
    %c0_12 = arith.constant 0 : index
    %19 = vector.load %arg4[%c0_11, %c0_12] : memref<64x128xf32, #tpu.memory_space<vmem>>, vector<64x128xf32>
    %20 = tpu.iota {dimensions = array<i32: 0>} : vector<8x1xi32>
    %c4_i32 = arith.constant 4 : i32
    %21 = vector.broadcast %c4_i32 : i32 to vector<8x1xi32>
    %22 = arith.cmpi slt, %20, %21 : vector<8x1xi32>
    %23 = arith.extui %22 : vector<8x1xi1> to vector<8x1xi32>
    %24 = arith.sitofp %23 : vector<8x1xi32> to vector<8x1xf32>
    %cst_13 = arith.constant 1.000000e+00 : f32
    %25 = vector.broadcast %cst_13 : f32 to vector<8x1xf32>
    %26 = arith.subf %25, %24 : vector<8x1xf32>
    %cst_14 = arith.constant 0.000000e+00 : f32
    %27 = vector.broadcast %cst_14 : f32 to vector<8x32xf32>
    %cst_15 = arith.constant 0.000000e+00 : f32
    %28 = vector.broadcast %cst_15 : f32 to vector<8x32xf32>
    %29 = vector.extract_strided_slice %14 {offsets = [0, 0], sizes = [4, 128], strides = [1, 1]} : vector<32x128xf32> to vector<4x128xf32>
    %30 = vector.extract_strided_slice %17 {offsets = [28, 0], sizes = [4, 128], strides = [1, 1]} : vector<32x128xf32> to vector<4x128xf32>
    %31 = tpu.concatenate %29, %30 in 0 : vector<4x128xf32>, vector<4x128xf32> -> vector<8x128xf32>
    %32 = vector.broadcast %24 : vector<8x1xf32> to vector<8x32xf32>
    %33 = arith.mulf %27, %32 : vector<8x32xf32>
    %34 = vector.broadcast %26 : vector<8x1xf32> to vector<8x32xf32>
    %35 = arith.mulf %27, %34 : vector<8x32xf32>
    %36 = tpu.concatenate %33, %35 in 1 : vector<8x32xf32>, vector<8x32xf32> -> vector<8x64xf32>
    %cst_16 = arith.constant dense<0.000000e+00> : vector<8x128xf32>
    %37 = tpu.matmul %36, %19, %cst_16 {dimension_numbers = #tpu.dot_dimension_numbers<[1], [0], [0], [1], [0, 0, 1, 1], [], []>} : vector<8x64xf32>, vector<64x128xf32>, vector<8x128xf32> -> vector<8x128xf32>
    %38 = arith.addf %31, %37 : vector<8x128xf32>
    %cst_17 = arith.constant 0.000000e+00 : f32
    %39 = vector.broadcast %cst_17 : f32 to vector<8x128xf32>
    %40 = arith.subf %39, %38 : vector<8x128xf32>
    %41 = math.exp %40 : vector<8x128xf32>
    %cst_18 = arith.constant 1.000000e+00 : f32
    %42 = vector.broadcast %cst_18 : f32 to vector<8x128xf32>
    %43 = arith.addf %42, %41 : vector<8x128xf32>
    %cst_19 = arith.constant 1.000000e+00 : f32
    %44 = vector.broadcast %cst_19 : f32 to vector<8x128xf32>
    %45 = arith.divf %44, %43 : vector<8x128xf32>
    %46 = vector.extract_strided_slice %45 {offsets = [0, 0], sizes = [8, 32], strides = [1, 1]} : vector<8x128xf32> to vector<8x32xf32>
    %47 = vector.extract_strided_slice %45 {offsets = [0, 32], sizes = [8, 32], strides = [1, 1]} : vector<8x128xf32> to vector<8x32xf32>
    %48 = vector.extract_strided_slice %45 {offsets = [0, 96], sizes = [8, 32], strides = [1, 1]} : vector<8x128xf32> to vector<8x32xf32>
    %49 = vector.extract_strided_slice %38 {offsets = [0, 64], sizes = [8, 32], strides = [1, 1]} : vector<8x128xf32> to vector<8x32xf32>
    %50 = math.tanh %49 : vector<8x32xf32>
    %51 = arith.mulf %47, %28 : vector<8x32xf32>
    %52 = arith.mulf %46, %50 : vector<8x32xf32>
    %53 = arith.addf %51, %52 : vector<8x32xf32>
    %54 = math.tanh %53 : vector<8x32xf32>
    %55 = arith.mulf %48, %54 : vector<8x32xf32>
    %c0_i32 = arith.constant 0 : i32
    %56 = vector.broadcast %c0_i32 : i32 to vector<4x1xi32>
    %57 = arith.cmpi sgt, %18, %56 : vector<4x1xi32>
    %58 = arith.extui %57 : vector<4x1xi1> to vector<4x1xi32>
    %59 = arith.sitofp %58 : vector<4x1xi32> to vector<4x1xf32>
    %c7_i32 = arith.constant 7 : i32
    %60 = vector.broadcast %c7_i32 : i32 to vector<4x1xi32>
    %61 = arith.cmpi sgt, %18, %60 : vector<4x1xi32>
    %62 = arith.extui %61 : vector<4x1xi1> to vector<4x1xi32>
    %63 = arith.sitofp %62 : vector<4x1xi32> to vector<4x1xf32>
    %64 = tpu.concatenate %59, %63 in 0 : vector<4x1xf32>, vector<4x1xf32> -> vector<8x1xf32>
    %65 = vector.broadcast %64 : vector<8x1xf32> to vector<8x32xf32>
    %66 = arith.mulf %65, %55 : vector<8x32xf32>
    %cst_20 = arith.constant 1.000000e+00 : f32
    %67 = vector.broadcast %cst_20 : f32 to vector<8x1xf32>
    %68 = arith.subf %67, %64 : vector<8x1xf32>
    %69 = vector.broadcast %68 : vector<8x1xf32> to vector<8x32xf32>
    %70 = arith.mulf %69, %27 : vector<8x32xf32>
    %71 = arith.addf %66, %70 : vector<8x32xf32>
    %72 = vector.broadcast %64 : vector<8x1xf32> to vector<8x32xf32>
    %73 = arith.mulf %72, %53 : vector<8x32xf32>
    %cst_21 = arith.constant 1.000000e+00 : f32
    %74 = vector.broadcast %cst_21 : f32 to vector<8x1xf32>
    %75 = arith.subf %74, %64 : vector<8x1xf32>
    %76 = vector.broadcast %75 : vector<8x1xf32> to vector<8x32xf32>
    %77 = arith.mulf %76, %28 : vector<8x32xf32>
    %78 = arith.addf %73, %77 : vector<8x32xf32>
    %79 = vector.extract_strided_slice %14 {offsets = [4, 0], sizes = [4, 128], strides = [1, 1]} : vector<32x128xf32> to vector<4x128xf32>
    %80 = vector.extract_strided_slice %17 {offsets = [24, 0], sizes = [4, 128], strides = [1, 1]} : vector<32x128xf32> to vector<4x128xf32>
    %81 = tpu.concatenate %79, %80 in 0 : vector<4x128xf32>, vector<4x128xf32> -> vector<8x128xf32>
    %82 = vector.broadcast %24 : vector<8x1xf32> to vector<8x32xf32>
    %83 = arith.mulf %71, %82 : vector<8x32xf32>
    %84 = vector.broadcast %26 : vector<8x1xf32> to vector<8x32xf32>
    %85 = arith.mulf %71, %84 : vector<8x32xf32>
    %86 = tpu.concatenate %83, %85 in 1 : vector<8x32xf32>, vector<8x32xf32> -> vector<8x64xf32>
    %cst_22 = arith.constant dense<0.000000e+00> : vector<8x128xf32>
    %87 = tpu.matmul %86, %19, %cst_22 {dimension_numbers = #tpu.dot_dimension_numbers<[1], [0], [0], [1], [0, 0, 1, 1], [], []>} : vector<8x64xf32>, vector<64x128xf32>, vector<8x128xf32> -> vector<8x128xf32>
    %88 = arith.addf %81, %87 : vector<8x128xf32>
    %cst_23 = arith.constant 0.000000e+00 : f32
    %89 = vector.broadcast %cst_23 : f32 to vector<8x128xf32>
    %90 = arith.subf %89, %88 : vector<8x128xf32>
    %91 = math.exp %90 : vector<8x128xf32>
    %cst_24 = arith.constant 1.000000e+00 : f32
    %92 = vector.broadcast %cst_24 : f32 to vector<8x128xf32>
    %93 = arith.addf %92, %91 : vector<8x128xf32>
    %cst_25 = arith.constant 1.000000e+00 : f32
    %94 = vector.broadcast %cst_25 : f32 to vector<8x128xf32>
    %95 = arith.divf %94, %93 : vector<8x128xf32>
    %96 = vector.extract_strided_slice %95 {offsets = [0, 0], sizes = [8, 32], strides = [1, 1]} : vector<8x128xf32> to vector<8x32xf32>
    %97 = vector.extract_strided_slice %95 {offsets = [0, 32], sizes = [8, 32], strides = [1, 1]} : vector<8x128xf32> to vector<8x32xf32>
    %98 = vector.extract_strided_slice %95 {offsets = [0, 96], sizes = [8, 32], strides = [1, 1]} : vector<8x128xf32> to vector<8x32xf32>
    %99 = vector.extract_strided_slice %88 {offsets = [0, 64], sizes = [8, 32], strides = [1, 1]} : vector<8x128xf32> to vector<8x32xf32>
    %100 = math.tanh %99 : vector<8x32xf32>
    %101 = arith.mulf %97, %78 : vector<8x32xf32>
    %102 = arith.mulf %96, %100 : vector<8x32xf32>
    %103 = arith.addf %101, %102 : vector<8x32xf32>
    %104 = math.tanh %103 : vector<8x32xf32>
    %105 = arith.mulf %98, %104 : vector<8x32xf32>
    %c1_i32 = arith.constant 1 : i32
    %106 = vector.broadcast %c1_i32 : i32 to vector<4x1xi32>
    %107 = arith.cmpi sgt, %18, %106 : vector<4x1xi32>
    %108 = arith.extui %107 : vector<4x1xi1> to vector<4x1xi32>
    %109 = arith.sitofp %108 : vector<4x1xi32> to vector<4x1xf32>
    %c6_i32 = arith.constant 6 : i32
    %110 = vector.broadcast %c6_i32 : i32 to vector<4x1xi32>
    %111 = arith.cmpi sgt, %18, %110 : vector<4x1xi32>
    %112 = arith.extui %111 : vector<4x1xi1> to vector<4x1xi32>
    %113 = arith.sitofp %112 : vector<4x1xi32> to vector<4x1xf32>
    %114 = tpu.concatenate %109, %113 in 0 : vector<4x1xf32>, vector<4x1xf32> -> vector<8x1xf32>
    %115 = vector.broadcast %114 : vector<8x1xf32> to vector<8x32xf32>
    %116 = arith.mulf %115, %105 : vector<8x32xf32>
    %cst_26 = arith.constant 1.000000e+00 : f32
    %117 = vector.broadcast %cst_26 : f32 to vector<8x1xf32>
    %118 = arith.subf %117, %114 : vector<8x1xf32>
    %119 = vector.broadcast %118 : vector<8x1xf32> to vector<8x32xf32>
    %120 = arith.mulf %119, %71 : vector<8x32xf32>
    %121 = arith.addf %116, %120 : vector<8x32xf32>
    %122 = vector.broadcast %114 : vector<8x1xf32> to vector<8x32xf32>
    %123 = arith.mulf %122, %103 : vector<8x32xf32>
    %cst_27 = arith.constant 1.000000e+00 : f32
    %124 = vector.broadcast %cst_27 : f32 to vector<8x1xf32>
    %125 = arith.subf %124, %114 : vector<8x1xf32>
    %126 = vector.broadcast %125 : vector<8x1xf32> to vector<8x32xf32>
    %127 = arith.mulf %126, %78 : vector<8x32xf32>
    %128 = arith.addf %123, %127 : vector<8x32xf32>
    %129 = vector.extract_strided_slice %14 {offsets = [8, 0], sizes = [4, 128], strides = [1, 1]} : vector<32x128xf32> to vector<4x128xf32>
    %130 = vector.extract_strided_slice %17 {offsets = [20, 0], sizes = [4, 128], strides = [1, 1]} : vector<32x128xf32> to vector<4x128xf32>
    %131 = tpu.concatenate %129, %130 in 0 : vector<4x128xf32>, vector<4x128xf32> -> vector<8x128xf32>
    %132 = vector.broadcast %24 : vector<8x1xf32> to vector<8x32xf32>
    %133 = arith.mulf %121, %132 : vector<8x32xf32>
    %134 = vector.broadcast %26 : vector<8x1xf32> to vector<8x32xf32>
    %135 = arith.mulf %121, %134 : vector<8x32xf32>
    %136 = tpu.concatenate %133, %135 in 1 : vector<8x32xf32>, vector<8x32xf32> -> vector<8x64xf32>
    %cst_28 = arith.constant dense<0.000000e+00> : vector<8x128xf32>
    %137 = tpu.matmul %136, %19, %cst_28 {dimension_numbers = #tpu.dot_dimension_numbers<[1], [0], [0], [1], [0, 0, 1, 1], [], []>} : vector<8x64xf32>, vector<64x128xf32>, vector<8x128xf32> -> vector<8x128xf32>
    %138 = arith.addf %131, %137 : vector<8x128xf32>
    %cst_29 = arith.constant 0.000000e+00 : f32
    %139 = vector.broadcast %cst_29 : f32 to vector<8x128xf32>
    %140 = arith.subf %139, %138 : vector<8x128xf32>
    %141 = math.exp %140 : vector<8x128xf32>
    %cst_30 = arith.constant 1.000000e+00 : f32
    %142 = vector.broadcast %cst_30 : f32 to vector<8x128xf32>
    %143 = arith.addf %142, %141 : vector<8x128xf32>
    %cst_31 = arith.constant 1.000000e+00 : f32
    %144 = vector.broadcast %cst_31 : f32 to vector<8x128xf32>
    %145 = arith.divf %144, %143 : vector<8x128xf32>
    %146 = vector.extract_strided_slice %145 {offsets = [0, 0], sizes = [8, 32], strides = [1, 1]} : vector<8x128xf32> to vector<8x32xf32>
    %147 = vector.extract_strided_slice %145 {offsets = [0, 32], sizes = [8, 32], strides = [1, 1]} : vector<8x128xf32> to vector<8x32xf32>
    %148 = vector.extract_strided_slice %145 {offsets = [0, 96], sizes = [8, 32], strides = [1, 1]} : vector<8x128xf32> to vector<8x32xf32>
    %149 = vector.extract_strided_slice %138 {offsets = [0, 64], sizes = [8, 32], strides = [1, 1]} : vector<8x128xf32> to vector<8x32xf32>
    %150 = math.tanh %149 : vector<8x32xf32>
    %151 = arith.mulf %147, %128 : vector<8x32xf32>
    %152 = arith.mulf %146, %150 : vector<8x32xf32>
    %153 = arith.addf %151, %152 : vector<8x32xf32>
    %154 = math.tanh %153 : vector<8x32xf32>
    %155 = arith.mulf %148, %154 : vector<8x32xf32>
    %c2_i32 = arith.constant 2 : i32
    %156 = vector.broadcast %c2_i32 : i32 to vector<4x1xi32>
    %157 = arith.cmpi sgt, %18, %156 : vector<4x1xi32>
    %158 = arith.extui %157 : vector<4x1xi1> to vector<4x1xi32>
    %159 = arith.sitofp %158 : vector<4x1xi32> to vector<4x1xf32>
    %c5_i32 = arith.constant 5 : i32
    %160 = vector.broadcast %c5_i32 : i32 to vector<4x1xi32>
    %161 = arith.cmpi sgt, %18, %160 : vector<4x1xi32>
    %162 = arith.extui %161 : vector<4x1xi1> to vector<4x1xi32>
    %163 = arith.sitofp %162 : vector<4x1xi32> to vector<4x1xf32>
    %164 = tpu.concatenate %159, %163 in 0 : vector<4x1xf32>, vector<4x1xf32> -> vector<8x1xf32>
    %165 = vector.broadcast %164 : vector<8x1xf32> to vector<8x32xf32>
    %166 = arith.mulf %165, %155 : vector<8x32xf32>
    %cst_32 = arith.constant 1.000000e+00 : f32
    %167 = vector.broadcast %cst_32 : f32 to vector<8x1xf32>
    %168 = arith.subf %167, %164 : vector<8x1xf32>
    %169 = vector.broadcast %168 : vector<8x1xf32> to vector<8x32xf32>
    %170 = arith.mulf %169, %121 : vector<8x32xf32>
    %171 = arith.addf %166, %170 : vector<8x32xf32>
    %172 = vector.broadcast %164 : vector<8x1xf32> to vector<8x32xf32>
    %173 = arith.mulf %172, %153 : vector<8x32xf32>
    %cst_33 = arith.constant 1.000000e+00 : f32
    %174 = vector.broadcast %cst_33 : f32 to vector<8x1xf32>
    %175 = arith.subf %174, %164 : vector<8x1xf32>
    %176 = vector.broadcast %175 : vector<8x1xf32> to vector<8x32xf32>
    %177 = arith.mulf %176, %128 : vector<8x32xf32>
    %178 = arith.addf %173, %177 : vector<8x32xf32>
    %179 = vector.extract_strided_slice %14 {offsets = [12, 0], sizes = [4, 128], strides = [1, 1]} : vector<32x128xf32> to vector<4x128xf32>
    %180 = vector.extract_strided_slice %17 {offsets = [16, 0], sizes = [4, 128], strides = [1, 1]} : vector<32x128xf32> to vector<4x128xf32>
    %181 = tpu.concatenate %179, %180 in 0 : vector<4x128xf32>, vector<4x128xf32> -> vector<8x128xf32>
    %182 = vector.broadcast %24 : vector<8x1xf32> to vector<8x32xf32>
    %183 = arith.mulf %171, %182 : vector<8x32xf32>
    %184 = vector.broadcast %26 : vector<8x1xf32> to vector<8x32xf32>
    %185 = arith.mulf %171, %184 : vector<8x32xf32>
    %186 = tpu.concatenate %183, %185 in 1 : vector<8x32xf32>, vector<8x32xf32> -> vector<8x64xf32>
    %cst_34 = arith.constant dense<0.000000e+00> : vector<8x128xf32>
    %187 = tpu.matmul %186, %19, %cst_34 {dimension_numbers = #tpu.dot_dimension_numbers<[1], [0], [0], [1], [0, 0, 1, 1], [], []>} : vector<8x64xf32>, vector<64x128xf32>, vector<8x128xf32> -> vector<8x128xf32>
    %188 = arith.addf %181, %187 : vector<8x128xf32>
    %cst_35 = arith.constant 0.000000e+00 : f32
    %189 = vector.broadcast %cst_35 : f32 to vector<8x128xf32>
    %190 = arith.subf %189, %188 : vector<8x128xf32>
    %191 = math.exp %190 : vector<8x128xf32>
    %cst_36 = arith.constant 1.000000e+00 : f32
    %192 = vector.broadcast %cst_36 : f32 to vector<8x128xf32>
    %193 = arith.addf %192, %191 : vector<8x128xf32>
    %cst_37 = arith.constant 1.000000e+00 : f32
    %194 = vector.broadcast %cst_37 : f32 to vector<8x128xf32>
    %195 = arith.divf %194, %193 : vector<8x128xf32>
    %196 = vector.extract_strided_slice %195 {offsets = [0, 0], sizes = [8, 32], strides = [1, 1]} : vector<8x128xf32> to vector<8x32xf32>
    %197 = vector.extract_strided_slice %195 {offsets = [0, 32], sizes = [8, 32], strides = [1, 1]} : vector<8x128xf32> to vector<8x32xf32>
    %198 = vector.extract_strided_slice %195 {offsets = [0, 96], sizes = [8, 32], strides = [1, 1]} : vector<8x128xf32> to vector<8x32xf32>
    %199 = vector.extract_strided_slice %188 {offsets = [0, 64], sizes = [8, 32], strides = [1, 1]} : vector<8x128xf32> to vector<8x32xf32>
    %200 = math.tanh %199 : vector<8x32xf32>
    %201 = arith.mulf %197, %178 : vector<8x32xf32>
    %202 = arith.mulf %196, %200 : vector<8x32xf32>
    %203 = arith.addf %201, %202 : vector<8x32xf32>
    %204 = math.tanh %203 : vector<8x32xf32>
    %205 = arith.mulf %198, %204 : vector<8x32xf32>
    %c3_i32 = arith.constant 3 : i32
    %206 = vector.broadcast %c3_i32 : i32 to vector<4x1xi32>
    %207 = arith.cmpi sgt, %18, %206 : vector<4x1xi32>
    %208 = arith.extui %207 : vector<4x1xi1> to vector<4x1xi32>
    %209 = arith.sitofp %208 : vector<4x1xi32> to vector<4x1xf32>
    %c4_i32_38 = arith.constant 4 : i32
    %210 = vector.broadcast %c4_i32_38 : i32 to vector<4x1xi32>
    %211 = arith.cmpi sgt, %18, %210 : vector<4x1xi32>
    %212 = arith.extui %211 : vector<4x1xi1> to vector<4x1xi32>
    %213 = arith.sitofp %212 : vector<4x1xi32> to vector<4x1xf32>
    %214 = tpu.concatenate %209, %213 in 0 : vector<4x1xf32>, vector<4x1xf32> -> vector<8x1xf32>
    %215 = vector.broadcast %214 : vector<8x1xf32> to vector<8x32xf32>
    %216 = arith.mulf %215, %205 : vector<8x32xf32>
    %cst_39 = arith.constant 1.000000e+00 : f32
    %217 = vector.broadcast %cst_39 : f32 to vector<8x1xf32>
    %218 = arith.subf %217, %214 : vector<8x1xf32>
    %219 = vector.broadcast %218 : vector<8x1xf32> to vector<8x32xf32>
    %220 = arith.mulf %219, %171 : vector<8x32xf32>
    %221 = arith.addf %216, %220 : vector<8x32xf32>
    %222 = vector.broadcast %214 : vector<8x1xf32> to vector<8x32xf32>
    %223 = arith.mulf %222, %203 : vector<8x32xf32>
    %cst_40 = arith.constant 1.000000e+00 : f32
    %224 = vector.broadcast %cst_40 : f32 to vector<8x1xf32>
    %225 = arith.subf %224, %214 : vector<8x1xf32>
    %226 = vector.broadcast %225 : vector<8x1xf32> to vector<8x32xf32>
    %227 = arith.mulf %226, %178 : vector<8x32xf32>
    %228 = arith.addf %223, %227 : vector<8x32xf32>
    %229 = vector.extract_strided_slice %14 {offsets = [16, 0], sizes = [4, 128], strides = [1, 1]} : vector<32x128xf32> to vector<4x128xf32>
    %230 = vector.extract_strided_slice %17 {offsets = [12, 0], sizes = [4, 128], strides = [1, 1]} : vector<32x128xf32> to vector<4x128xf32>
    %231 = tpu.concatenate %229, %230 in 0 : vector<4x128xf32>, vector<4x128xf32> -> vector<8x128xf32>
    %232 = vector.broadcast %24 : vector<8x1xf32> to vector<8x32xf32>
    %233 = arith.mulf %221, %232 : vector<8x32xf32>
    %234 = vector.broadcast %26 : vector<8x1xf32> to vector<8x32xf32>
    %235 = arith.mulf %221, %234 : vector<8x32xf32>
    %236 = tpu.concatenate %233, %235 in 1 : vector<8x32xf32>, vector<8x32xf32> -> vector<8x64xf32>
    %cst_41 = arith.constant dense<0.000000e+00> : vector<8x128xf32>
    %237 = tpu.matmul %236, %19, %cst_41 {dimension_numbers = #tpu.dot_dimension_numbers<[1], [0], [0], [1], [0, 0, 1, 1], [], []>} : vector<8x64xf32>, vector<64x128xf32>, vector<8x128xf32> -> vector<8x128xf32>
    %238 = arith.addf %231, %237 : vector<8x128xf32>
    %cst_42 = arith.constant 0.000000e+00 : f32
    %239 = vector.broadcast %cst_42 : f32 to vector<8x128xf32>
    %240 = arith.subf %239, %238 : vector<8x128xf32>
    %241 = math.exp %240 : vector<8x128xf32>
    %cst_43 = arith.constant 1.000000e+00 : f32
    %242 = vector.broadcast %cst_43 : f32 to vector<8x128xf32>
    %243 = arith.addf %242, %241 : vector<8x128xf32>
    %cst_44 = arith.constant 1.000000e+00 : f32
    %244 = vector.broadcast %cst_44 : f32 to vector<8x128xf32>
    %245 = arith.divf %244, %243 : vector<8x128xf32>
    %246 = vector.extract_strided_slice %245 {offsets = [0, 0], sizes = [8, 32], strides = [1, 1]} : vector<8x128xf32> to vector<8x32xf32>
    %247 = vector.extract_strided_slice %245 {offsets = [0, 32], sizes = [8, 32], strides = [1, 1]} : vector<8x128xf32> to vector<8x32xf32>
    %248 = vector.extract_strided_slice %245 {offsets = [0, 96], sizes = [8, 32], strides = [1, 1]} : vector<8x128xf32> to vector<8x32xf32>
    %249 = vector.extract_strided_slice %238 {offsets = [0, 64], sizes = [8, 32], strides = [1, 1]} : vector<8x128xf32> to vector<8x32xf32>
    %250 = math.tanh %249 : vector<8x32xf32>
    %251 = arith.mulf %247, %228 : vector<8x32xf32>
    %252 = arith.mulf %246, %250 : vector<8x32xf32>
    %253 = arith.addf %251, %252 : vector<8x32xf32>
    %254 = math.tanh %253 : vector<8x32xf32>
    %255 = arith.mulf %248, %254 : vector<8x32xf32>
    %c4_i32_45 = arith.constant 4 : i32
    %256 = vector.broadcast %c4_i32_45 : i32 to vector<4x1xi32>
    %257 = arith.cmpi sgt, %18, %256 : vector<4x1xi32>
    %258 = arith.extui %257 : vector<4x1xi1> to vector<4x1xi32>
    %259 = arith.sitofp %258 : vector<4x1xi32> to vector<4x1xf32>
    %c3_i32_46 = arith.constant 3 : i32
    %260 = vector.broadcast %c3_i32_46 : i32 to vector<4x1xi32>
    %261 = arith.cmpi sgt, %18, %260 : vector<4x1xi32>
    %262 = arith.extui %261 : vector<4x1xi1> to vector<4x1xi32>
    %263 = arith.sitofp %262 : vector<4x1xi32> to vector<4x1xf32>
    %264 = tpu.concatenate %259, %263 in 0 : vector<4x1xf32>, vector<4x1xf32> -> vector<8x1xf32>
    %265 = vector.broadcast %264 : vector<8x1xf32> to vector<8x32xf32>
    %266 = arith.mulf %265, %255 : vector<8x32xf32>
    %cst_47 = arith.constant 1.000000e+00 : f32
    %267 = vector.broadcast %cst_47 : f32 to vector<8x1xf32>
    %268 = arith.subf %267, %264 : vector<8x1xf32>
    %269 = vector.broadcast %268 : vector<8x1xf32> to vector<8x32xf32>
    %270 = arith.mulf %269, %221 : vector<8x32xf32>
    %271 = arith.addf %266, %270 : vector<8x32xf32>
    %272 = vector.broadcast %264 : vector<8x1xf32> to vector<8x32xf32>
    %273 = arith.mulf %272, %253 : vector<8x32xf32>
    %cst_48 = arith.constant 1.000000e+00 : f32
    %274 = vector.broadcast %cst_48 : f32 to vector<8x1xf32>
    %275 = arith.subf %274, %264 : vector<8x1xf32>
    %276 = vector.broadcast %275 : vector<8x1xf32> to vector<8x32xf32>
    %277 = arith.mulf %276, %228 : vector<8x32xf32>
    %278 = arith.addf %273, %277 : vector<8x32xf32>
    %279 = vector.extract_strided_slice %14 {offsets = [20, 0], sizes = [4, 128], strides = [1, 1]} : vector<32x128xf32> to vector<4x128xf32>
    %280 = vector.extract_strided_slice %17 {offsets = [8, 0], sizes = [4, 128], strides = [1, 1]} : vector<32x128xf32> to vector<4x128xf32>
    %281 = tpu.concatenate %279, %280 in 0 : vector<4x128xf32>, vector<4x128xf32> -> vector<8x128xf32>
    %282 = vector.broadcast %24 : vector<8x1xf32> to vector<8x32xf32>
    %283 = arith.mulf %271, %282 : vector<8x32xf32>
    %284 = vector.broadcast %26 : vector<8x1xf32> to vector<8x32xf32>
    %285 = arith.mulf %271, %284 : vector<8x32xf32>
    %286 = tpu.concatenate %283, %285 in 1 : vector<8x32xf32>, vector<8x32xf32> -> vector<8x64xf32>
    %cst_49 = arith.constant dense<0.000000e+00> : vector<8x128xf32>
    %287 = tpu.matmul %286, %19, %cst_49 {dimension_numbers = #tpu.dot_dimension_numbers<[1], [0], [0], [1], [0, 0, 1, 1], [], []>} : vector<8x64xf32>, vector<64x128xf32>, vector<8x128xf32> -> vector<8x128xf32>
    %288 = arith.addf %281, %287 : vector<8x128xf32>
    %cst_50 = arith.constant 0.000000e+00 : f32
    %289 = vector.broadcast %cst_50 : f32 to vector<8x128xf32>
    %290 = arith.subf %289, %288 : vector<8x128xf32>
    %291 = math.exp %290 : vector<8x128xf32>
    %cst_51 = arith.constant 1.000000e+00 : f32
    %292 = vector.broadcast %cst_51 : f32 to vector<8x128xf32>
    %293 = arith.addf %292, %291 : vector<8x128xf32>
    %cst_52 = arith.constant 1.000000e+00 : f32
    %294 = vector.broadcast %cst_52 : f32 to vector<8x128xf32>
    %295 = arith.divf %294, %293 : vector<8x128xf32>
    %296 = vector.extract_strided_slice %295 {offsets = [0, 0], sizes = [8, 32], strides = [1, 1]} : vector<8x128xf32> to vector<8x32xf32>
    %297 = vector.extract_strided_slice %295 {offsets = [0, 32], sizes = [8, 32], strides = [1, 1]} : vector<8x128xf32> to vector<8x32xf32>
    %298 = vector.extract_strided_slice %295 {offsets = [0, 96], sizes = [8, 32], strides = [1, 1]} : vector<8x128xf32> to vector<8x32xf32>
    %299 = vector.extract_strided_slice %288 {offsets = [0, 64], sizes = [8, 32], strides = [1, 1]} : vector<8x128xf32> to vector<8x32xf32>
    %300 = math.tanh %299 : vector<8x32xf32>
    %301 = arith.mulf %297, %278 : vector<8x32xf32>
    %302 = arith.mulf %296, %300 : vector<8x32xf32>
    %303 = arith.addf %301, %302 : vector<8x32xf32>
    %304 = math.tanh %303 : vector<8x32xf32>
    %305 = arith.mulf %298, %304 : vector<8x32xf32>
    %c5_i32_53 = arith.constant 5 : i32
    %306 = vector.broadcast %c5_i32_53 : i32 to vector<4x1xi32>
    %307 = arith.cmpi sgt, %18, %306 : vector<4x1xi32>
    %308 = arith.extui %307 : vector<4x1xi1> to vector<4x1xi32>
    %309 = arith.sitofp %308 : vector<4x1xi32> to vector<4x1xf32>
    %c2_i32_54 = arith.constant 2 : i32
    %310 = vector.broadcast %c2_i32_54 : i32 to vector<4x1xi32>
    %311 = arith.cmpi sgt, %18, %310 : vector<4x1xi32>
    %312 = arith.extui %311 : vector<4x1xi1> to vector<4x1xi32>
    %313 = arith.sitofp %312 : vector<4x1xi32> to vector<4x1xf32>
    %314 = tpu.concatenate %309, %313 in 0 : vector<4x1xf32>, vector<4x1xf32> -> vector<8x1xf32>
    %315 = vector.broadcast %314 : vector<8x1xf32> to vector<8x32xf32>
    %316 = arith.mulf %315, %305 : vector<8x32xf32>
    %cst_55 = arith.constant 1.000000e+00 : f32
    %317 = vector.broadcast %cst_55 : f32 to vector<8x1xf32>
    %318 = arith.subf %317, %314 : vector<8x1xf32>
    %319 = vector.broadcast %318 : vector<8x1xf32> to vector<8x32xf32>
    %320 = arith.mulf %319, %271 : vector<8x32xf32>
    %321 = arith.addf %316, %320 : vector<8x32xf32>
    %322 = vector.broadcast %314 : vector<8x1xf32> to vector<8x32xf32>
    %323 = arith.mulf %322, %303 : vector<8x32xf32>
    %cst_56 = arith.constant 1.000000e+00 : f32
    %324 = vector.broadcast %cst_56 : f32 to vector<8x1xf32>
    %325 = arith.subf %324, %314 : vector<8x1xf32>
    %326 = vector.broadcast %325 : vector<8x1xf32> to vector<8x32xf32>
    %327 = arith.mulf %326, %278 : vector<8x32xf32>
    %328 = arith.addf %323, %327 : vector<8x32xf32>
    %329 = vector.extract_strided_slice %14 {offsets = [24, 0], sizes = [4, 128], strides = [1, 1]} : vector<32x128xf32> to vector<4x128xf32>
    %330 = vector.extract_strided_slice %17 {offsets = [4, 0], sizes = [4, 128], strides = [1, 1]} : vector<32x128xf32> to vector<4x128xf32>
    %331 = tpu.concatenate %329, %330 in 0 : vector<4x128xf32>, vector<4x128xf32> -> vector<8x128xf32>
    %332 = vector.broadcast %24 : vector<8x1xf32> to vector<8x32xf32>
    %333 = arith.mulf %321, %332 : vector<8x32xf32>
    %334 = vector.broadcast %26 : vector<8x1xf32> to vector<8x32xf32>
    %335 = arith.mulf %321, %334 : vector<8x32xf32>
    %336 = tpu.concatenate %333, %335 in 1 : vector<8x32xf32>, vector<8x32xf32> -> vector<8x64xf32>
    %cst_57 = arith.constant dense<0.000000e+00> : vector<8x128xf32>
    %337 = tpu.matmul %336, %19, %cst_57 {dimension_numbers = #tpu.dot_dimension_numbers<[1], [0], [0], [1], [0, 0, 1, 1], [], []>} : vector<8x64xf32>, vector<64x128xf32>, vector<8x128xf32> -> vector<8x128xf32>
    %338 = arith.addf %331, %337 : vector<8x128xf32>
    %cst_58 = arith.constant 0.000000e+00 : f32
    %339 = vector.broadcast %cst_58 : f32 to vector<8x128xf32>
    %340 = arith.subf %339, %338 : vector<8x128xf32>
    %341 = math.exp %340 : vector<8x128xf32>
    %cst_59 = arith.constant 1.000000e+00 : f32
    %342 = vector.broadcast %cst_59 : f32 to vector<8x128xf32>
    %343 = arith.addf %342, %341 : vector<8x128xf32>
    %cst_60 = arith.constant 1.000000e+00 : f32
    %344 = vector.broadcast %cst_60 : f32 to vector<8x128xf32>
    %345 = arith.divf %344, %343 : vector<8x128xf32>
    %346 = vector.extract_strided_slice %345 {offsets = [0, 0], sizes = [8, 32], strides = [1, 1]} : vector<8x128xf32> to vector<8x32xf32>
    %347 = vector.extract_strided_slice %345 {offsets = [0, 32], sizes = [8, 32], strides = [1, 1]} : vector<8x128xf32> to vector<8x32xf32>
    %348 = vector.extract_strided_slice %345 {offsets = [0, 96], sizes = [8, 32], strides = [1, 1]} : vector<8x128xf32> to vector<8x32xf32>
    %349 = vector.extract_strided_slice %338 {offsets = [0, 64], sizes = [8, 32], strides = [1, 1]} : vector<8x128xf32> to vector<8x32xf32>
    %350 = math.tanh %349 : vector<8x32xf32>
    %351 = arith.mulf %347, %328 : vector<8x32xf32>
    %352 = arith.mulf %346, %350 : vector<8x32xf32>
    %353 = arith.addf %351, %352 : vector<8x32xf32>
    %354 = math.tanh %353 : vector<8x32xf32>
    %355 = arith.mulf %348, %354 : vector<8x32xf32>
    %c6_i32_61 = arith.constant 6 : i32
    %356 = vector.broadcast %c6_i32_61 : i32 to vector<4x1xi32>
    %357 = arith.cmpi sgt, %18, %356 : vector<4x1xi32>
    %358 = arith.extui %357 : vector<4x1xi1> to vector<4x1xi32>
    %359 = arith.sitofp %358 : vector<4x1xi32> to vector<4x1xf32>
    %c1_i32_62 = arith.constant 1 : i32
    %360 = vector.broadcast %c1_i32_62 : i32 to vector<4x1xi32>
    %361 = arith.cmpi sgt, %18, %360 : vector<4x1xi32>
    %362 = arith.extui %361 : vector<4x1xi1> to vector<4x1xi32>
    %363 = arith.sitofp %362 : vector<4x1xi32> to vector<4x1xf32>
    %364 = tpu.concatenate %359, %363 in 0 : vector<4x1xf32>, vector<4x1xf32> -> vector<8x1xf32>
    %365 = vector.broadcast %364 : vector<8x1xf32> to vector<8x32xf32>
    %366 = arith.mulf %365, %355 : vector<8x32xf32>
    %cst_63 = arith.constant 1.000000e+00 : f32
    %367 = vector.broadcast %cst_63 : f32 to vector<8x1xf32>
    %368 = arith.subf %367, %364 : vector<8x1xf32>
    %369 = vector.broadcast %368 : vector<8x1xf32> to vector<8x32xf32>
    %370 = arith.mulf %369, %321 : vector<8x32xf32>
    %371 = arith.addf %366, %370 : vector<8x32xf32>
    %372 = vector.broadcast %364 : vector<8x1xf32> to vector<8x32xf32>
    %373 = arith.mulf %372, %353 : vector<8x32xf32>
    %cst_64 = arith.constant 1.000000e+00 : f32
    %374 = vector.broadcast %cst_64 : f32 to vector<8x1xf32>
    %375 = arith.subf %374, %364 : vector<8x1xf32>
    %376 = vector.broadcast %375 : vector<8x1xf32> to vector<8x32xf32>
    %377 = arith.mulf %376, %328 : vector<8x32xf32>
    %378 = arith.addf %373, %377 : vector<8x32xf32>
    %379 = vector.extract_strided_slice %14 {offsets = [28, 0], sizes = [4, 128], strides = [1, 1]} : vector<32x128xf32> to vector<4x128xf32>
    %380 = vector.extract_strided_slice %17 {offsets = [0, 0], sizes = [4, 128], strides = [1, 1]} : vector<32x128xf32> to vector<4x128xf32>
    %381 = tpu.concatenate %379, %380 in 0 : vector<4x128xf32>, vector<4x128xf32> -> vector<8x128xf32>
    %382 = vector.broadcast %24 : vector<8x1xf32> to vector<8x32xf32>
    %383 = arith.mulf %371, %382 : vector<8x32xf32>
    %384 = vector.broadcast %26 : vector<8x1xf32> to vector<8x32xf32>
    %385 = arith.mulf %371, %384 : vector<8x32xf32>
    %386 = tpu.concatenate %383, %385 in 1 : vector<8x32xf32>, vector<8x32xf32> -> vector<8x64xf32>
    %cst_65 = arith.constant dense<0.000000e+00> : vector<8x128xf32>
    %387 = tpu.matmul %386, %19, %cst_65 {dimension_numbers = #tpu.dot_dimension_numbers<[1], [0], [0], [1], [0, 0, 1, 1], [], []>} : vector<8x64xf32>, vector<64x128xf32>, vector<8x128xf32> -> vector<8x128xf32>
    %388 = arith.addf %381, %387 : vector<8x128xf32>
    %cst_66 = arith.constant 0.000000e+00 : f32
    %389 = vector.broadcast %cst_66 : f32 to vector<8x128xf32>
    %390 = arith.subf %389, %388 : vector<8x128xf32>
    %391 = math.exp %390 : vector<8x128xf32>
    %cst_67 = arith.constant 1.000000e+00 : f32
    %392 = vector.broadcast %cst_67 : f32 to vector<8x128xf32>
    %393 = arith.addf %392, %391 : vector<8x128xf32>
    %cst_68 = arith.constant 1.000000e+00 : f32
    %394 = vector.broadcast %cst_68 : f32 to vector<8x128xf32>
    %395 = arith.divf %394, %393 : vector<8x128xf32>
    %396 = vector.extract_strided_slice %395 {offsets = [0, 0], sizes = [8, 32], strides = [1, 1]} : vector<8x128xf32> to vector<8x32xf32>
    %397 = vector.extract_strided_slice %395 {offsets = [0, 32], sizes = [8, 32], strides = [1, 1]} : vector<8x128xf32> to vector<8x32xf32>
    %398 = vector.extract_strided_slice %395 {offsets = [0, 96], sizes = [8, 32], strides = [1, 1]} : vector<8x128xf32> to vector<8x32xf32>
    %399 = vector.extract_strided_slice %388 {offsets = [0, 64], sizes = [8, 32], strides = [1, 1]} : vector<8x128xf32> to vector<8x32xf32>
    %400 = math.tanh %399 : vector<8x32xf32>
    %401 = arith.mulf %397, %378 : vector<8x32xf32>
    %402 = arith.mulf %396, %400 : vector<8x32xf32>
    %403 = arith.addf %401, %402 : vector<8x32xf32>
    %404 = math.tanh %403 : vector<8x32xf32>
    %405 = arith.mulf %398, %404 : vector<8x32xf32>
    %c7_i32_69 = arith.constant 7 : i32
    %406 = vector.broadcast %c7_i32_69 : i32 to vector<4x1xi32>
    %407 = arith.cmpi sgt, %18, %406 : vector<4x1xi32>
    %408 = arith.extui %407 : vector<4x1xi1> to vector<4x1xi32>
    %409 = arith.sitofp %408 : vector<4x1xi32> to vector<4x1xf32>
    %c0_i32_70 = arith.constant 0 : i32
    %410 = vector.broadcast %c0_i32_70 : i32 to vector<4x1xi32>
    %411 = arith.cmpi sgt, %18, %410 : vector<4x1xi32>
    %412 = arith.extui %411 : vector<4x1xi1> to vector<4x1xi32>
    %413 = arith.sitofp %412 : vector<4x1xi32> to vector<4x1xf32>
    %414 = tpu.concatenate %409, %413 in 0 : vector<4x1xf32>, vector<4x1xf32> -> vector<8x1xf32>
    %415 = vector.broadcast %414 : vector<8x1xf32> to vector<8x32xf32>
    %416 = arith.mulf %415, %405 : vector<8x32xf32>
    %cst_71 = arith.constant 1.000000e+00 : f32
    %417 = vector.broadcast %cst_71 : f32 to vector<8x1xf32>
    %418 = arith.subf %417, %414 : vector<8x1xf32>
    %419 = vector.broadcast %418 : vector<8x1xf32> to vector<8x32xf32>
    %420 = arith.mulf %419, %371 : vector<8x32xf32>
    %421 = arith.addf %416, %420 : vector<8x32xf32>
    %422 = vector.extract_strided_slice %421 {offsets = [0, 0], sizes = [4, 32], strides = [1, 1]} : vector<8x32xf32> to vector<4x32xf32>
    %423 = vector.extract_strided_slice %421 {offsets = [4, 0], sizes = [4, 32], strides = [1, 1]} : vector<8x32xf32> to vector<4x32xf32>
    %424 = tpu.concatenate %422, %423 in 1 : vector<4x32xf32>, vector<4x32xf32> -> vector<4x64xf32>
    %c0_72 = arith.constant 0 : index
    %c0_73 = arith.constant 0 : index
    %425 = vector.load %arg5[%c0_72, %c0_73] : memref<64x192xf32, #tpu.memory_space<vmem>>, vector<64x64xf32>
    %c2 = arith.constant 2 : index
    %c0_74 = arith.constant 0 : index
    %426 = vector.load %arg6[%c2, %c0_74] : memref<11x128xf32, #tpu.memory_space<vmem>>, vector<1x64xf32>
    %c3 = arith.constant 3 : index
    %c0_75 = arith.constant 0 : index
    %427 = vector.load %arg6[%c3, %c0_75] : memref<11x128xf32, #tpu.memory_space<vmem>>, vector<1x64xf32>
    %c4 = arith.constant 4 : index
    %c0_76 = arith.constant 0 : index
    %428 = vector.load %arg6[%c4, %c0_76] : memref<11x128xf32, #tpu.memory_space<vmem>>, vector<1x64xf32>
    %cst_77 = arith.constant dense<0.000000e+00> : vector<4x64xf32>
    %429 = tpu.matmul %424, %425, %cst_77 {dimension_numbers = #tpu.dot_dimension_numbers<[1], [0], [0], [1], [0, 0, 1, 1], [], []>} : vector<4x64xf32>, vector<64x64xf32>, vector<4x64xf32> -> vector<4x64xf32>
    %430 = vector.broadcast %426 : vector<1x64xf32> to vector<4x64xf32>
    %431 = arith.addf %429, %430 : vector<4x64xf32>
    %432 = vector.broadcast %427 : vector<1x64xf32> to vector<4x64xf32>
    %433 = arith.mulf %431, %432 : vector<4x64xf32>
    %434 = vector.broadcast %428 : vector<1x64xf32> to vector<4x64xf32>
    %435 = arith.addf %433, %434 : vector<4x64xf32>
    %c5 = arith.constant 5 : index
    %c0_78 = arith.constant 0 : index
    %436 = vector.load %arg6[%c5, %c0_78] : memref<11x128xf32, #tpu.memory_space<vmem>>, vector<1x64xf32>
    %c6 = arith.constant 6 : index
    %c0_79 = arith.constant 0 : index
    %437 = vector.load %arg6[%c6, %c0_79] : memref<11x128xf32, #tpu.memory_space<vmem>>, vector<1x64xf32>
    %c7 = arith.constant 7 : index
    %c0_80 = arith.constant 0 : index
    %438 = vector.load %arg6[%c7, %c0_80] : memref<11x128xf32, #tpu.memory_space<vmem>>, vector<1x64xf32>
    %c8 = arith.constant 8 : index
    %c0_81 = arith.constant 0 : index
    %439 = vector.load %arg6[%c8, %c0_81] : memref<11x128xf32, #tpu.memory_space<vmem>>, vector<1x64xf32>
    %c9 = arith.constant 9 : index
    %c0_82 = arith.constant 0 : index
    %440 = vector.load %arg6[%c9, %c0_82] : memref<11x128xf32, #tpu.memory_space<vmem>>, vector<1x64xf32>
    %c10 = arith.constant 10 : index
    %c0_83 = arith.constant 0 : index
    %441 = vector.load %arg6[%c10, %c0_83] : memref<11x128xf32, #tpu.memory_space<vmem>>, vector<1x64xf32>
    %c0_84 = arith.constant 0 : index
    %c64 = arith.constant 64 : index
    %442 = vector.load %arg5[%c0_84, %c64] : memref<64x192xf32, #tpu.memory_space<vmem>>, vector<64x64xf32>
    %c0_85 = arith.constant 0 : index
    %c128 = arith.constant 128 : index
    %443 = vector.load %arg5[%c0_85, %c128] : memref<64x192xf32, #tpu.memory_space<vmem>>, vector<64x64xf32>
    %c0_86 = arith.constant 0 : index
    %c0_87 = arith.constant 0 : index
    %444 = vector.load %arg7[%c0_86, %c0_87] : memref<16x16xf32, #tpu.memory_space<vmem>>, vector<16x16xf32>
    %c0_88 = arith.constant 0 : index
    %c0_89 = arith.constant 0 : index
    %445 = vector.load %arg8[%c0_88, %c0_89] : memref<16x1xf32, #tpu.memory_space<vmem>>, vector<16x1xf32>
    %446 = vector.broadcast %445 : vector<16x1xf32> to vector<16x64xf32>
    %447 = vector.broadcast %436 : vector<1x64xf32> to vector<16x64xf32>
    %448 = arith.mulf %446, %447 : vector<16x64xf32>
    %cst_90 = arith.constant dense<0.000000e+00> : vector<16x64xf32>
    %449 = tpu.matmul %444, %448, %cst_90 {dimension_numbers = #tpu.dot_dimension_numbers<[1], [0], [0], [1], [0, 0, 1, 1], [], []>} : vector<16x16xf32>, vector<16x64xf32>, vector<16x64xf32> -> vector<16x64xf32>
    %450 = vector.broadcast %437 : vector<1x64xf32> to vector<16x64xf32>
    %451 = arith.addf %449, %450 : vector<16x64xf32>
    %cst_91 = arith.constant 0.000000e+00 : f32
    %452 = vector.broadcast %cst_91 : f32 to vector<16x64xf32>
    %453 = arith.maximumf %451, %452 : vector<16x64xf32>
    %cst_92 = arith.constant dense<0.000000e+00> : vector<16x64xf32>
    %454 = tpu.matmul %453, %442, %cst_92 {dimension_numbers = #tpu.dot_dimension_numbers<[1], [0], [0], [1], [0, 0, 1, 1], [], []>} : vector<16x64xf32>, vector<64x64xf32>, vector<16x64xf32> -> vector<16x64xf32>
    %cst_93 = arith.constant dense<0.000000e+00> : vector<16x64xf32>
    %455 = tpu.matmul %444, %454, %cst_93 {dimension_numbers = #tpu.dot_dimension_numbers<[1], [0], [0], [1], [0, 0, 1, 1], [], []>} : vector<16x16xf32>, vector<16x64xf32>, vector<16x64xf32> -> vector<16x64xf32>
    %456 = vector.broadcast %438 : vector<1x64xf32> to vector<16x64xf32>
    %457 = arith.addf %455, %456 : vector<16x64xf32>
    %cst_94 = arith.constant 0.000000e+00 : f32
    %458 = vector.broadcast %cst_94 : f32 to vector<16x64xf32>
    %459 = arith.maximumf %457, %458 : vector<16x64xf32>
    %c0_95 = arith.constant 0 : index
    %c0_96 = arith.constant 0 : index
    %460 = vector.load %arg9[%c0_95, %c0_96] : memref<4x16xf32, #tpu.memory_space<vmem>>, vector<4x16xf32>
    %cst_97 = arith.constant dense<0.000000e+00> : vector<4x64xf32>
    %461 = tpu.matmul %460, %459, %cst_97 {dimension_numbers = #tpu.dot_dimension_numbers<[1], [0], [0], [1], [0, 0, 1, 1], [], []>} : vector<4x16xf32>, vector<16x64xf32>, vector<4x64xf32> -> vector<4x64xf32>
    %cst_98 = arith.constant dense<0.000000e+00> : vector<4x64xf32>
    %462 = tpu.matmul %461, %443, %cst_98 {dimension_numbers = #tpu.dot_dimension_numbers<[1], [0], [0], [1], [0, 0, 1, 1], [], []>} : vector<4x64xf32>, vector<64x64xf32>, vector<4x64xf32> -> vector<4x64xf32>
    %463 = vector.broadcast %439 : vector<1x64xf32> to vector<4x64xf32>
    %464 = arith.addf %462, %463 : vector<4x64xf32>
    %465 = vector.broadcast %440 : vector<1x64xf32> to vector<4x64xf32>
    %466 = arith.mulf %464, %465 : vector<4x64xf32>
    %467 = vector.broadcast %441 : vector<1x64xf32> to vector<4x64xf32>
    %468 = arith.addf %466, %467 : vector<4x64xf32>
    %469 = arith.addf %468, %435 : vector<4x64xf32>
    %cst_99 = arith.constant 0.000000e+00 : f32
    %470 = vector.broadcast %cst_99 : f32 to vector<4x64xf32>
    %471 = arith.maximumf %469, %470 : vector<4x64xf32>
    %cst_100 = arith.constant 0.000000e+00 : f32
    %472 = vector.broadcast %cst_100 : f32 to vector<4x64xf32>
    %473 = tpu.concatenate %471, %472 in 1 : vector<4x64xf32>, vector<4x64xf32> -> vector<4x128xf32>
    %c0_101 = arith.constant 0 : index
    %c0_102 = arith.constant 0 : index
    %474 = vector.load %arg10[%c0_101, %c0_102] : memref<4x128xf32, #tpu.memory_space<vmem>>, vector<4x128xf32>
    tpu.vector_store %arg10[%c0_101, %c0_102], %473 {strides = array<i32>} : memref<4x128xf32, #tpu.memory_space<vmem>>, vector<4x128xf32>,
    return
  }
}

</mosaic_0001>

<llo_original>
// kernel: gt_block_forward.1
$region0: #{gt_block_forward.1}
  #allocation0 [shape = 'u32[]', space=smem, size = 0x4, offset = 0x4, fixed_abs, tag = 'smem constant byte address 0x4 - core index']
  #allocation1 [shape = 'u32[144,128]{1,0:T(1,128)}', space=vmem, size = 0x12000, scoped, tag = 'internal scratch']
  %s0 = inlined_call_operand.vmem [shape: s32[32,1], index: 0, kind: input, shape index: {}]
  %s1 = inlined_call_operand.vmem [shape: s32[4,1], index: 1, kind: input, shape index: {}]
  %s2 = inlined_call_operand.hbm [shape: f32[32,32], index: 2, kind: input, shape index: {}]
  %s3 = inlined_call_operand.vmem [shape: f32[32,256], index: 3, kind: input, shape index: {}]
  %s4 = inlined_call_operand.hbm [shape: f32[64,128], index: 4, kind: input, shape index: {}]
  %s5 = inlined_call_operand.hbm [shape: f32[64,192], index: 5, kind: input, shape index: {}]
  %s6 = inlined_call_operand.vmem [shape: f32[11,128], index: 6, kind: input, shape index: {}]
  %s7 = inlined_call_operand.hbm [shape: f32[16,16], index: 7, kind: input, shape index: {}]
  %s8 = inlined_call_operand.vmem [shape: f32[16,1], index: 8, kind: input, shape index: {}]
  %s9 = inlined_call_operand.hbm [shape: f32[4,16], index: 9, kind: input, shape index: {}]
  %s10 = inlined_call_operand.hbm [shape: f32[4,128], index: 10, kind: output, shape index: {}]
  %s11 = sld [smem:[#allocation0]]
  $region70: #{gt_block_forward.1} parent=0
    _
  %s13 = ssub.s32 1, %s11
  %s14 = scalar_select 0, %s13, %s11
  $region1: #{gt_block_forward.1} parent=0
    #allocation2 [shape = 'u8[16384]{0}', space=vmem, size = 0x4000, scoped, tag = 'input window, operand 2, single buffered']
    #allocation3 [shape = 's32[1]{0}', space=sflag, size = 0x4, scoped, tag = 'scoped memory for gt_block_forward.1']
    #allocation4 [shape = 's32[1]{0}', space=sflag, size = 0x4, scoped, tag = 'scoped memory for gt_block_forward.1']
    #allocation5 [shape = 'u8[32768]{0}', space=vmem, size = 0x8000, scoped, tag = 'input window, operand 4, single buffered']
    #allocation6 [shape = 's32[1]{0}', space=sflag, size = 0x4, scoped, tag = 'scoped memory for gt_block_forward.1']
    #allocation7 [shape = 'u8[65536]{0}', space=vmem, size = 0x10000, scoped, tag = 'input window, operand 5, single buffered']
    #allocation8 [shape = 'u8[8192]{0}', space=vmem, size = 0x2000, scoped, tag = 'input window, operand 7, single buffered']
    #allocation9 [shape = 's32[1]{0}', space=sflag, size = 0x4, scoped, tag = 'scoped memory for gt_block_forward.1']
    #allocation10 [shape = 'u8[2048]{0}', space=vmem, size = 0x800, scoped, tag = 'input window, operand 9, single buffered']
    #allocation11 [shape = 'u8[2048]{0}', space=vmem, size = 0x800, scoped, tag = 'output window, operand 0, single buffered']
    %15 = vsyncpa [#allocation3], 0
    %16 = vsyncpa [#allocation6], 0
    %17 = vsyncpa [#allocation9], 0
    %18 = vsyncpa [#allocation4], 0
    // Predicated region
    $region2: #{gt_block_forward.1} parent=1 // pred_check
      _
    $region3: #{gt_block_forward.1} parent=1 // pred_check_branch
      %20 = sbr.rel (0) target = $region5
    $region4: #{gt_block_forward.1} parent=1 // pred_region
      _
    $region5: #{gt_block_forward.1} parent=1 // pred_fallthru
      _
    // Predicated region
    $region6: #{gt_block_forward.1} parent=1 // pred_check
      _
    $region7: #{gt_block_forward.1} parent=1 // pred_check_branch
      %22 = sbr.rel (0) target = $region9
    $region8: #{gt_block_forward.1} parent=1 // pred_region
      _
    $region9: #{gt_block_forward.1} parent=1 // pred_fallthru
      _
    // Predicated region
    $region10: #{gt_block_forward.1} parent=1 // pred_check
      _
    $region11: #{gt_block_forward.1} parent=1 // pred_check_branch
      %24 = sbr.rel (0) target = $region13
    $region12: #{gt_block_forward.1} parent=1 // pred_region
      %s26 = ssub.s32 512, 512
      %27 = vsyncadd [#allocation3], %s26
      %s28 = sshll.u32 [#allocation2], 4
      %s29 = int_to_ptr.vmem [resolvable:$true] %s28
      %34 = dma.hbm_to_vmem [thread:$0]  %s2, 512, %s29, [#allocation3], 128, 128, 8
    $region13: #{gt_block_forward.1} parent=1 // pred_fallthru
      _
    // Predicated region
    $region14: #{gt_block_forward.1} parent=1 // pred_check
      _
    $region15: #{gt_block_forward.1} parent=1 // pred_check_branch
      %36 = sbr.rel (0) target = $region17
    $region16: #{gt_block_forward.1} parent=1 // pred_region
      _
    $region17: #{gt_block_forward.1} parent=1 // pred_fallthru
      _
    // Predicated region
    $region18: #{gt_block_forward.1} parent=1 // pred_check
      _
    $region19: #{gt_block_forward.1} parent=1 // pred_check_branch
      %38 = sbr.rel (0) target = $region21
    $region20: #{gt_block_forward.1} parent=1 // pred_region
      %s40 = ssub.s32 1024, 1024
      %41 = vsyncadd [#allocation6], %s40
      %s42 = sshll.u32 [#allocation5], 4
      %s43 = int_to_ptr.vmem [resolvable:$true] %s42
      %48 = dma.hbm_to_vmem [thread:$0]  %s4, 1024, %s43, [#allocation6], 128, 128, 8
    $region21: #{gt_block_forward.1} parent=1 // pred_fallthru
      _
    // Predicated region
    $region22: #{gt_block_forward.1} parent=1 // pred_check
      _
    $region23: #{gt_block_forward.1} parent=1 // pred_check_branch
      %50 = sbr.rel (0) target = $region25
    $region24: #{gt_block_forward.1} parent=1 // pred_region
      %s52 = ssub.s32 2048, 2048
      %53 = vsyncadd [#allocation6], %s52
      %s54 = sshll.u32 [#allocation7], 4
      %s55 = int_to_ptr.vmem [resolvable:$true] %s54
      %60 = dma.hbm_to_vmem [thread:$0]  %s5, 2048, %s55, [#allocation6], 256, 256, 16
    $region25: #{gt_block_forward.1} parent=1 // pred_fallthru
      _
    // Predicated region
    $region26: #{gt_block_forward.1} parent=1 // pred_check
      _
    $region27: #{gt_block_forward.1} parent=1 // pred_check_branch
      %62 = sbr.rel (0) target = $region29
    $region28: #{gt_block_forward.1} parent=1 // pred_region
      _
    $region29: #{gt_block_forward.1} parent=1 // pred_fallthru
      _
    // Predicated region
    $region30: #{gt_block_forward.1} parent=1 // pred_check
      _
    $region31: #{gt_block_forward.1} parent=1 // pred_check_branch
      %64 = sbr.rel (0) target = $region33
    $region32: #{gt_block_forward.1} parent=1 // pred_region
      %s66 = ssub.s32 256, 256
      %67 = vsyncadd [#allocation9], %s66
      %s68 = sshll.u32 [#allocation8], 4
      %s69 = int_to_ptr.vmem [resolvable:$true] %s68
      %74 = dma.hbm_to_vmem [thread:$0]  %s7, 256, %s69, [#allocation9], 128, 128, 8
    $region33: #{gt_block_forward.1} parent=1 // pred_fallthru
      _
    // Predicated region
    $region34: #{gt_block_forward.1} parent=1 // pred_check
      _
    $region35: #{gt_block_forward.1} parent=1 // pred_check_branch
      %76 = sbr.rel (0) target = $region37
    $region36: #{gt_block_forward.1} parent=1 // pred_region
      _
    $region37: #{gt_block_forward.1} parent=1 // pred_fallthru
      _
    // Predicated region
    $region38: #{gt_block_forward.1} parent=1 // pred_check
      _
    $region39: #{gt_block_forward.1} parent=1 // pred_check_branch
      %78 = sbr.rel (0) target = $region41
    $region40: #{gt_block_forward.1} parent=1 // pred_region
      %s80 = ssub.s32 64, 64
      %81 = vsyncadd [#allocation9], %s80
      %s83 = sshll.u32 [#allocation10], 4
      %s84 = int_to_ptr.vmem [resolvable:$true] %s83
      %86 = dma.hbm_to_vmem [thread:$0]  %s9, 64, %s84, [#allocation9]
    $region41: #{gt_block_forward.1} parent=1 // pred_fallthru
      _
    // Predicated region
    $region42: #{gt_block_forward.1} parent=1 // pred_check
      _
    $region43: #{gt_block_forward.1} parent=1 // pred_check_branch
      %88 = sbr.rel (0) target = $region45
    $region44: #{gt_block_forward.1} parent=1 // pred_region
      %89 = dma.done [#allocation3], 512
    $region45: #{gt_block_forward.1} parent=1 // pred_fallthru
      _
    // Predicated region
    $region46: #{gt_block_forward.1} parent=1 // pred_check
      _
    $region47: #{gt_block_forward.1} parent=1 // pred_check_branch
      %91 = sbr.rel (0) target = $region49
    $region48: #{gt_block_forward.1} parent=1 // pred_region
      %92 = dma.done [#allocation6], 1024
    $region49: #{gt_block_forward.1} parent=1 // pred_fallthru
      _
    // Predicated region
    $region50: #{gt_block_forward.1} parent=1 // pred_check
      _
    $region51: #{gt_block_forward.1} parent=1 // pred_check_branch
      %94 = sbr.rel (0) target = $region53
    $region52: #{gt_block_forward.1} parent=1 // pred_region
      %95 = dma.done [#allocation6], 2048
    $region53: #{gt_block_forward.1} parent=1 // pred_fallthru
      _
    // Predicated region
    $region54: #{gt_block_forward.1} parent=1 // pred_check
      _
    $region55: #{gt_block_forward.1} parent=1 // pred_check_branch
      %97 = sbr.rel (0) target = $region57
    $region56: #{gt_block_forward.1} parent=1 // pred_region
      %98 = dma.done [#allocation9], 256
    $region57: #{gt_block_forward.1} parent=1 // pred_fallthru
      _
    // Predicated region
    $region58: #{gt_block_forward.1} parent=1 // pred_check
      _
    $region59: #{gt_block_forward.1} parent=1 // pred_check_branch
      %100 = sbr.rel (0) target = $region61
    $region60: #{gt_block_forward.1} parent=1 // pred_region
      %101 = dma.done [#allocation9], 64
    $region61: #{gt_block_forward.1} parent=1 // pred_fallthru
      _
    %v102 = vld [vmem:[%s0] sm:$0xff]
    %v103 = vld [vmem:[%s0 + $0x8] sm:$0xff]
    %v104 = vld [vmem:[%s0 + $0x10] sm:$0xff]
    %v105 = vld [vmem:[%s0 + $0x18] sm:$0xff]
    %v106 = vlaneseq
    %v107 = vand.u32 %v106, 127
    %108 = vset.pattern.permute.xlu0 0
    %109 = vperm.xlu0 %108, %v102
    %v110 = vpop.permute.xlu0 %109
    %111 = vset.pattern.permute.xlu0 0
    %112 = vperm.xlu0 %111, %v103
    %v113 = vpop.permute.xlu0 %112
    %114 = vset.pattern.permute.xlu0 0
    %115 = vperm.xlu0 %114, %v104
    %v116 = vpop.permute.xlu0 %115
    %117 = vset.pattern.permute.xlu0 0
    %118 = vperm.xlu0 %117, %v105
    %v119 = vpop.permute.xlu0 %118
    %vm120 = vcmp.eq.s32.totalorder %v110, %v107
    %vm121 = vcmp.eq.s32.totalorder %v113, %v107
    %vm122 = vcmp.eq.s32.totalorder %v116, %v107
    %vm123 = vcmp.eq.s32.totalorder %v119, %v107
    %v124 = vsel %vm120, 1, 0
    %v125 = vsel %vm121, 1, 0
    %v126 = vsel %vm122, 1, 0
    %v127 = vsel %vm123, 1, 0
    %v128 = vcvt.s32.f32 %v124
    %v129 = vcvt.s32.f32 %v125
    %v130 = vcvt.s32.f32 %v126
    %v131 = vcvt.s32.f32 %v127
    %v132 = vld [vmem:[#allocation2] sm:$0xff]
    %v133 = vld [vmem:[#allocation2 + $0x8] sm:$0xff]
    %v134 = vld [vmem:[#allocation2 + $0x10] sm:$0xff]
    %v135 = vld [vmem:[#allocation2 + $0x18] sm:$0xff]
    %vm136 = vcmask 261120
    %v138 = vsel %vm136, %v128, 0
    %v141 = vsel %vm136, %v129, 0
    %v144 = vsel %vm136, %v130, 0
    %v147 = vsel %vm136, %v131, 0
    %149 = vmatprep.subr.mxu0 0.0
    %150 = vmatpush1.msra.mxu0 0.0
    %151 = vmatprep.subr.mxu0 0.0
    %152 = vmatpush1.msra.mxu0 0.0
    %153 = vmatprep.subr.mxu0 0.0
    %154 = vmatpush1.msra.mxu0 0.0
    %155 = vmatprep.subr.mxu0 0.0
    %156 = vmatpush1.msra.mxu0 0.0
    %157 = vmatprep.subr.mxu0 0.0
    %158 = vmatpush1.msra.mxu0 0.0
    %159 = vmatprep.subr.mxu0 0.0
    %160 = vmatpush1.msra.mxu0 0.0
    %161 = vmatprep.subr.mxu0 0.0
    %162 = vmatpush1.msra.mxu0 0.0
    %163 = vmatprep.subr.mxu0 0.0
    %164 = vmatpush1.msra.mxu0 0.0
    %165 = vmatprep.subr.mxu0 0.0
    %166 = vmatpush1.msra.mxu0 0.0
    %167 = vmatprep.subr.mxu0 0.0
    %168 = vmatpush1.msra.mxu0 0.0
    %169 = vmatprep.subr.mxu0 0.0
    %170 = vmatpush1.msra.mxu0 0.0
    %171 = vmatprep.subr.mxu0 0.0
    %172 = vmatpush1.msra.mxu0 0.0
    %173 = vmatprep.subr.mxu0 0.0
    %174 = vmatpush1.msra.mxu0 %v135
    %175 = vmatprep.subr.mxu0 0.0
    %176 = vmatpush1.msra.mxu0 %v134
    %177 = vmatprep.subr.mxu0 0.0
    %178 = vmatpush1.msra.mxu0 %v133
    %179 = vmatprep.subr.mxu0 0.0
    %180 = vmatpush1.msra.mxu0 %v132
    %181 = vmatprep.subr.mxu0 0.0
    %182 = vmatpush2.msra.mxu0 0.0
    %183 = vmatprep.subr.mxu0 0.0
    %184 = vmatpush2.msra.mxu0 0.0
    %185 = vmatprep.subr.mxu0 0.0
    %186 = vmatpush2.msra.mxu0 0.0
    %187 = vmatprep.subr.mxu0 0.0
    %188 = vmatpush2.msra.mxu0 0.0
    %189 = vmatprep.subr.mxu0 0.0
    %190 = vmatpush2.msra.mxu0 0.0
    %191 = vmatprep.subr.mxu0 0.0
    %192 = vmatpush2.msra.mxu0 0.0
    %193 = vmatprep.subr.mxu0 0.0
    %194 = vmatpush2.msra.mxu0 0.0
    %195 = vmatprep.subr.mxu0 0.0
    %196 = vmatpush2.msra.mxu0 0.0
    %197 = vmatprep.subr.mxu0 0.0
    %198 = vmatpush2.msra.mxu0 0.0
    %199 = vmatprep.subr.mxu0 0.0
    %200 = vmatpush2.msra.mxu0 0.0
    %201 = vmatprep.subr.mxu0 0.0
    %202 = vmatpush2.msra.mxu0 0.0
    %203 = vmatprep.subr.mxu0 0.0
    %204 = vmatpush2.msra.mxu0 0.0
    %205 = vmatprep.subr.mxu0 0.0
    %206 = vmatpush2.msra.mxu0 0.0
    %207 = vmatprep.subr.mxu0 0.0
    %208 = vmatpush2.msra.mxu0 0.0
    %209 = vmatprep.subr.mxu0 0.0
    %210 = vmatpush2.msra.mxu0 0.0
    %211 = vmatprep.subr.mxu0 0.0
    %212 = vmatpush2.msra.mxu0 0.0
    %213 = vmatprep.mubr.f32.mxu0 0.0
    %214 = vmatmul.mubr.f32.gmra.mxu0 %v138
    %v215 = vpop.f32.mrf.mxu0
    %v216 = vadd.f32 0.0, %v215
    %v217 = vpop.f32.mrf.mxu0
    %218 = vmatprep.mubr.f32.mxu0 0.0
    %219 = vmatmul.mubr.f32.gmra.mxu0 %v141
    %v220 = vpop.f32.mrf.mxu0
    %v221 = vadd.f32 0.0, %v220
    %v222 = vpop.f32.mrf.mxu0
    %223 = vmatprep.mubr.f32.mxu0 0.0
    %224 = vmatmul.mubr.f32.gmra.mxu0 %v144
    %v225 = vpop.f32.mrf.mxu0
    %v226 = vadd.f32 0.0, %v225
    %v227 = vpop.f32.mrf.mxu0
    %228 = vmatprep.mubr.f32.mxu0 0.0
    %229 = vmatmul.mubr.f32.gmra.mxu0 %v147
    %v230 = vpop.f32.mrf.mxu0
    %v231 = vadd.f32 0.0, %v230
    %v232 = vpop.f32.mrf.mxu0
    %233 = vdwg.mxu0
    %v234 = vld [vmem:[%s3] sm:$0xff]
    %v235 = vld [vmem:[%s3 + $0x8] sm:$0xff]
    %v236 = vld [vmem:[%s3 + $0x10] sm:$0xff]
    %v237 = vld [vmem:[%s3 + $0x18] sm:$0xff]
    %v238 = vld [vmem:[%s3 + $0x20] sm:$0xff]
    %v239 = vld [vmem:[%s3 + $0x28] sm:$0xff]
    %v240 = vld [vmem:[%s3 + $0x30] sm:$0xff]
    %v241 = vld [vmem:[%s3 + $0x38] sm:$0xff]
    %v243 = vsel %vm136, %v216, 0
    %v246 = vsel %vm136, %v221, 0
    %v249 = vsel %vm136, %v226, 0
    %v252 = vsel %vm136, %v231, 0
    %254 = vmatprep.subr.mxu0 0.0
    %255 = vmatpush1.msra.mxu0 0.0
    %256 = vmatprep.subr.mxu0 0.0
    %257 = vmatpush1.msra.mxu0 0.0
    %258 = vmatprep.subr.mxu0 0.0
    %259 = vmatpush1.msra.mxu0 0.0
    %260 = vmatprep.subr.mxu0 0.0
    %261 = vmatpush1.msra.mxu0 0.0
    %262 = vmatprep.subr.mxu0 0.0
    %263 = vmatpush1.msra.mxu0 0.0
    %264 = vmatprep.subr.mxu0 0.0
    %265 = vmatpush1.msra.mxu0 0.0
    %266 = vmatprep.subr.mxu0 0.0
    %267 = vmatpush1.msra.mxu0 0.0
    %268 = vmatprep.subr.mxu0 0.0
    %269 = vmatpush1.msra.mxu0 0.0
    %270 = vmatprep.subr.mxu0 0.0
    %271 = vmatpush1.msra.mxu0 0.0
    %272 = vmatprep.subr.mxu0 0.0
    %273 = vmatpush1.msra.mxu0 0.0
    %274 = vmatprep.subr.mxu0 0.0
    %275 = vmatpush1.msra.mxu0 0.0
    %276 = vmatprep.subr.mxu0 0.0
    %277 = vmatpush1.msra.mxu0 0.0
    %278 = vmatprep.subr.mxu0 %v241
    %279 = vmatpush1.msra.mxu0 %v240
    %280 = vmatprep.subr.mxu0 %v239
    %281 = vmatpush1.msra.mxu0 %v238
    %282 = vmatprep.subr.mxu0 %v237
    %283 = vmatpush1.msra.mxu0 %v236
    %284 = vmatprep.subr.mxu0 %v235
    %285 = vmatpush1.msra.mxu0 %v234
    %286 = vmatprep.subr.mxu0 0.0
    %287 = vmatpush2.msra.mxu0 0.0
    %288 = vmatprep.subr.mxu0 0.0
    %289 = vmatpush2.msra.mxu0 0.0
    %290 = vmatprep.subr.mxu0 0.0
    %291 = vmatpush2.msra.mxu0 0.0
    %292 = vmatprep.subr.mxu0 0.0
    %293 = vmatpush2.msra.mxu0 0.0
    %294 = vmatprep.subr.mxu0 0.0
    %295 = vmatpush2.msra.mxu0 0.0
    %296 = vmatprep.subr.mxu0 0.0
    %297 = vmatpush2.msra.mxu0 0.0
    %298 = vmatprep.subr.mxu0 0.0
    %299 = vmatpush2.msra.mxu0 0.0
    %300 = vmatprep.subr.mxu0 0.0
    %301 = vmatpush2.msra.mxu0 0.0
    %302 = vmatprep.subr.mxu0 0.0
    %303 = vmatpush2.msra.mxu0 0.0
    %304 = vmatprep.subr.mxu0 0.0
    %305 = vmatpush2.msra.mxu0 0.0
    %306 = vmatprep.subr.mxu0 0.0
    %307 = vmatpush2.msra.mxu0 0.0
    %308 = vmatprep.subr.mxu0 0.0
    %309 = vmatpush2.msra.mxu0 0.0
    %310 = vmatprep.subr.mxu0 0.0
    %311 = vmatpush2.msra.mxu0 0.0
    %312 = vmatprep.subr.mxu0 0.0
    %313 = vmatpush2.msra.mxu0 0.0
    %314 = vmatprep.subr.mxu0 0.0
    %315 = vmatpush2.msra.mxu0 0.0
    %316 = vmatprep.subr.mxu0 0.0
    %317 = vmatpush2.msra.mxu0 0.0
    %318 = vmatprep.mubr.f32.mxu0 0.0
    %319 = vmatmul.mubr.f32.gmra.mxu0 %v243
    %v320 = vpop.f32.mrf.mxu0
    %v321 = vadd.f32 0.0, %v320
    %v322 = vpop.f32.mrf.mxu0
    %v323 = vadd.f32 0.0, %v322
    %324 = vmatprep.mubr.f32.mxu0 0.0
    %325 = vmatmul.mubr.f32.gmra.mxu0 %v246
    %v326 = vpop.f32.mrf.mxu0
    %v327 = vadd.f32 0.0, %v326
    %v328 = vpop.f32.mrf.mxu0
    %v329 = vadd.f32 0.0, %v328
    %330 = vmatprep.mubr.f32.mxu0 0.0
    %331 = vmatmul.mubr.f32.gmra.mxu0 %v249
    %v332 = vpop.f32.mrf.mxu0
    %v333 = vadd.f32 0.0, %v332
    %v334 = vpop.f32.mrf.mxu0
    %v335 = vadd.f32 0.0, %v334
    %336 = vmatprep.mubr.f32.mxu0 0.0
    %337 = vmatmul.mubr.f32.gmra.mxu0 %v252
    %v338 = vpop.f32.mrf.mxu0
    %v339 = vadd.f32 0.0, %v338
    %v340 = vpop.f32.mrf.mxu0
    %v341 = vadd.f32 0.0, %v340
    %342 = vdwg.mxu0
    %v343 = vld [vmem:[%s6] sm:$0x1]
    %v344 = vld [vmem:[%s6 + $0x1] sm:$0x1]
    %v345 = vlaneseq
    %v346 = vshrl.u32 %v345, 7
    %v347 = vsub.s32 0, %v346
    %v348 = vrot.slane %v343, %v347
    %v349 = vadd.f32 %v321, %v348
    %v350 = vadd.f32 %v327, %v348
    %v351 = vadd.f32 %v333, %v348
    %v352 = vadd.f32 %v339, %v348
    %v353 = vlaneseq
    %v354 = vshrl.u32 %v353, 7
    %v355 = vsub.s32 0, %v354
    %v356 = vrot.slane %v344, %v355
    %v357 = vadd.f32 %v323, %v356
    %v358 = vadd.f32 %v329, %v356
    %v359 = vadd.f32 %v335, %v356
    %v360 = vadd.f32 %v341, %v356
    %v361 = vld [vmem:[%s1] sm:$0xf]
    %v362 = vld [vmem:[#allocation5] sm:$0xff]
    %v363 = vld [vmem:[#allocation5 + $0x8] sm:$0xff]
    %v364 = vld [vmem:[#allocation5 + $0x10] sm:$0xff]
    %v365 = vld [vmem:[#allocation5 + $0x18] sm:$0xff]
    %v366 = vld [vmem:[#allocation5 + $0x20] sm:$0xff]
    %v367 = vld [vmem:[#allocation5 + $0x28] sm:$0xff]
    %v368 = vld [vmem:[#allocation5 + $0x30] sm:$0xff]
    %v369 = vld [vmem:[#allocation5 + $0x38] sm:$0xff]
    %v370 = vlaneseq
    %v371 = vshrl.u32 %v370, 7
    %vm372 = vcmp.lt.s32.totalorder %v371, 4
    %v373 = vsel %vm372, 1, 0
    %v374 = vcvt.s32.f32 %v373
    %v375 = vsub.f32 1.0, %v374
    %vm376 = vcmask 1043456
    %v377 = vsel %vm376, %v349, %v360
    %v378 = vmul.f32 %v374, 0.0
    %v379 = vmul.f32 %v375, 0.0
    %v380 = vsel %vm136, %v378, %v379
    %vm381 = vcmask 523264
    %v383 = vsel %vm381, %v380, 0
    %385 = vmatprep.subr.mxu0 0.0
    %386 = vmatpush1.msra.mxu0 0.0
    %387 = vmatprep.subr.mxu0 0.0
    %388 = vmatpush1.msra.mxu0 0.0
    %389 = vmatprep.subr.mxu0 0.0
    %390 = vmatpush1.msra.mxu0 0.0
    %391 = vmatprep.subr.mxu0 0.0
    %392 = vmatpush1.msra.mxu0 0.0
    %393 = vmatprep.subr.mxu0 0.0
    %394 = vmatpush1.msra.mxu0 0.0
    %395 = vmatprep.subr.mxu0 0.0
    %396 = vmatpush1.msra.mxu0 0.0
    %397 = vmatprep.subr.mxu0 0.0
    %398 = vmatpush1.msra.mxu0 0.0
    %399 = vmatprep.subr.mxu0 0.0
    %400 = vmatpush1.msra.mxu0 0.0
    %401 = vmatprep.subr.mxu0 0.0
    %402 = vmatpush1.msra.mxu0 %v369
    %403 = vmatprep.subr.mxu0 0.0
    %404 = vmatpush1.msra.mxu0 %v368
    %405 = vmatprep.subr.mxu0 0.0
    %406 = vmatpush1.msra.mxu0 %v367
    %407 = vmatprep.subr.mxu0 0.0
    %408 = vmatpush1.msra.mxu0 %v366
    %409 = vmatprep.subr.mxu0 0.0
    %410 = vmatpush1.msra.mxu0 %v365
    %411 = vmatprep.subr.mxu0 0.0
    %412 = vmatpush1.msra.mxu0 %v364
    %413 = vmatprep.subr.mxu0 0.0
    %414 = vmatpush1.msra.mxu0 %v363
    %415 = vmatprep.subr.mxu0 0.0
    %416 = vmatpush1.msra.mxu0 %v362
    %417 = vmatprep.subr.mxu0 0.0
    %418 = vmatpush2.msra.mxu0 0.0
    %419 = vmatprep.subr.mxu0 0.0
    %420 = vmatpush2.msra.mxu0 0.0
    %421 = vmatprep.subr.mxu0 0.0
    %422 = vmatpush2.msra.mxu0 0.0
    %423 = vmatprep.subr.mxu0 0.0
    %424 = vmatpush2.msra.mxu0 0.0
    %425 = vmatprep.subr.mxu0 0.0
    %426 = vmatpush2.msra.mxu0 0.0
    %427 = vmatprep.subr.mxu0 0.0
    %428 = vmatpush2.msra.mxu0 0.0
    %429 = vmatprep.subr.mxu0 0.0
    %430 = vmatpush2.msra.mxu0 0.0
    %431 = vmatprep.subr.mxu0 0.0
    %432 = vmatpush2.msra.mxu0 0.0
    %433 = vmatprep.subr.mxu0 0.0
    %434 = vmatpush2.msra.mxu0 0.0
    %435 = vmatprep.subr.mxu0 0.0
    %436 = vmatpush2.msra.mxu0 0.0
    %437 = vmatprep.subr.mxu0 0.0
    %438 = vmatpush2.msra.mxu0 0.0
    %439 = vmatprep.subr.mxu0 0.0
    %440 = vmatpush2.msra.mxu0 0.0
    %441 = vmatprep.subr.mxu0 0.0
    %442 = vmatpush2.msra.mxu0 0.0
    %443 = vmatprep.subr.mxu0 0.0
    %444 = vmatpush2.msra.mxu0 0.0
    %445 = vmatprep.subr.mxu0 0.0
    %446 = vmatpush2.msra.mxu0 0.0
    %447 = vmatprep.subr.mxu0 0.0
    %448 = vmatpush2.msra.mxu0 0.0
    %449 = vmatprep.mubr.f32.mxu0 0.0
    %450 = vmatmul.mubr.f32.gmra.mxu0 %v383
    %v451 = vpop.f32.mrf.mxu0
    %v452 = vadd.f32 0.0, %v451
    %v453 = vpop.f32.mrf.mxu0
    %454 = vdwg.mxu0
    %v455 = vadd.f32 %v377, %v452
    %v456 = vsub.f32 0.0, %v455
    %v457 = vmul.f32 %v456, 1.442695
    %v458 = vpow.pop %v457
    %v459 = vadd.f32 %v458, 1.0
    %v460 = vrcp.pop %v459
    %v461 = vmul.f32 1.0, %v460
    %v462 = vtanh.pop %v455
    %v463 = vmul.f32 %v461, 0.0
    %465 = vrot.lane.b32.xlu0 %v462, 64
    %v466 = vpop.permute.xlu0 %465
    %v468 = vmul.f32 %v461, %v466
    %470 = vrot.lane.b32.xlu0 %v468, 32
    %v471 = vpop.permute.xlu0 %470
    %v473 = vadd.f32 %v463, %v471
    %v474 = vtanh.pop %v473
    %476 = vrot.lane.b32.xlu0 %v474, 64
    %v477 = vpop.permute.xlu0 %476
    %v479 = vmul.f32 %v461, %v477
    %vm480 = vcmp.gt.s32.totalorder %v361, 0
    %v481 = vsel %vm480, 1, 0
    %v482 = vcvt.s32.f32 %v481
    %vm483 = vcmp.gt.s32.totalorder %v361, 7
    %v484 = vsel %vm483, 1, 0
    %v485 = vcvt.s32.f32 %v484
    %v487 = vrot.slane %v485, 4
    %v489 = vsel %vm376, %v482, %v487
    %491 = vset.pattern.permute.xlu0 0
    %492 = vperm.xlu0 %491, %v489
    %v493 = vpop.permute.xlu0 %492
    %v495 = vmul.f32 %v493, %v479
    %v496 = vsub.f32 1.0, %v489
    %498 = vset.pattern.permute.xlu0 0
    %499 = vperm.xlu0 %498, %v496
    %v500 = vpop.permute.xlu0 %499
    %v502 = vmul.f32 %v500, 0.0
    %v503 = vadd.f32 %v495, %v502
    %v504 = vmul.f32 %v493, %v473
    %v505 = vadd.f32 %v504, %v502
    %v507 = vrot.slane %v349, 4
    %v510 = vrot.slane %v360, 4
    %v512 = vsel %vm376, %v507, %v510
    %v513 = vmul.f32 %v503, %v374
    %v514 = vmul.f32 %v503, %v375
    %516 = vrot.lane.b32.xlu0 %v513, 32
    %v517 = vpop.permute.xlu0 %516
    %520 = vrot.lane.b32.xlu0 %v514, 64
    %v521 = vpop.permute.xlu0 %520
    %v523 = vsel %vm136, %v517, %v521
    %v525 = vsel %vm381, %v523, 0
    %527 = vmatprep.subr.mxu0 0.0
    %528 = vmatpush1.msra.mxu0 0.0
    %529 = vmatprep.subr.mxu0 0.0
    %530 = vmatpush1.msra.mxu0 0.0
    %531 = vmatprep.subr.mxu0 0.0
    %532 = vmatpush1.msra.mxu0 0.0
    %533 = vmatprep.subr.mxu0 0.0
    %534 = vmatpush1.msra.mxu0 0.0
    %535 = vmatprep.subr.mxu0 0.0
    %536 = vmatpush1.msra.mxu0 0.0
    %537 = vmatprep.subr.mxu0 0.0
    %538 = vmatpush1.msra.mxu0 0.0
    %539 = vmatprep.subr.mxu0 0.0
    %540 = vmatpush1.msra.mxu0 0.0
    %541 = vmatprep.subr.mxu0 0.0
    %542 = vmatpush1.msra.mxu0 0.0
    %543 = vmatprep.subr.mxu0 0.0
    %544 = vmatpush1.msra.mxu0 %v369
    %545 = vmatprep.subr.mxu0 0.0
    %546 = vmatpush1.msra.mxu0 %v368
    %547 = vmatprep.subr.mxu0 0.0
    %548 = vmatpush1.msra.mxu0 %v367
    %549 = vmatprep.subr.mxu0 0.0
    %550 = vmatpush1.msra.mxu0 %v366
    %551 = vmatprep.subr.mxu0 0.0
    %552 = vmatpush1.msra.mxu0 %v365
    %553 = vmatprep.subr.mxu0 0.0
    %554 = vmatpush1.msra.mxu0 %v364
    %555 = vmatprep.subr.mxu0 0.0
    %556 = vmatpush1.msra.mxu0 %v363
    %557 = vmatprep.subr.mxu0 0.0
    %558 = vmatpush1.msra.mxu0 %v362
    %559 = vmatprep.subr.mxu0 0.0
    %560 = vmatpush2.msra.mxu0 0.0
    %561 = vmatprep.subr.mxu0 0.0
    %562 = vmatpush2.msra.mxu0 0.0
    %563 = vmatprep.subr.mxu0 0.0
    %564 = vmatpush2.msra.mxu0 0.0
    %565 = vmatprep.subr.mxu0 0.0
    %566 = vmatpush2.msra.mxu0 0.0
    %567 = vmatprep.subr.mxu0 0.0
    %568 = vmatpush2.msra.mxu0 0.0
    %569 = vmatprep.subr.mxu0 0.0
    %570 = vmatpush2.msra.mxu0 0.0
    %571 = vmatprep.subr.mxu0 0.0
    %572 = vmatpush2.msra.mxu0 0.0
    %573 = vmatprep.subr.mxu0 0.0
    %574 = vmatpush2.msra.mxu0 0.0
    %575 = vmatprep.subr.mxu0 0.0
    %576 = vmatpush2.msra.mxu0 0.0
    %577 = vmatprep.subr.mxu0 0.0
    %578 = vmatpush2.msra.mxu0 0.0
    %579 = vmatprep.subr.mxu0 0.0
    %580 = vmatpush2.msra.mxu0 0.0
    %581 = vmatprep.subr.mxu0 0.0
    %582 = vmatpush2.msra.mxu0 0.0
    %583 = vmatprep.subr.mxu0 0.0
    %584 = vmatpush2.msra.mxu0 0.0
    %585 = vmatprep.subr.mxu0 0.0
    %586 = vmatpush2.msra.mxu0 0.0
    %587 = vmatprep.subr.mxu0 0.0
    %588 = vmatpush2.msra.mxu0 0.0
    %589 = vmatprep.subr.mxu0 0.0
    %590 = vmatpush2.msra.mxu0 0.0
    %591 = vmatprep.mubr.f32.mxu0 0.0
    %592 = vmatmul.mubr.f32.gmra.mxu0 %v525
    %v593 = vpop.f32.mrf.mxu0
    %v594 = vadd.f32 0.0, %v593
    %v595 = vpop.f32.mrf.mxu0
    %596 = vdwg.mxu0
    %v597 = vadd.f32 %v512, %v594
    %v598 = vsub.f32 0.0, %v597
    %v599 = vmul.f32 %v598, 1.442695
    %v600 = vpow.pop %v599
    %v601 = vadd.f32 %v600, 1.0
    %v602 = vrcp.pop %v601
    %v603 = vmul.f32 1.0, %v602
    %v604 = vtanh.pop %v597
    %v605 = vmul.f32 %v603, %v505
    %607 = vrot.lane.b32.xlu0 %v604, 64
    %v608 = vpop.permute.xlu0 %607
    %v610 = vmul.f32 %v603, %v608
    %612 = vrot.lane.b32.xlu0 %v610, 32
    %v613 = vpop.permute.xlu0 %612
    %v615 = vadd.f32 %v605, %v613
    %v616 = vtanh.pop %v615
    %618 = vrot.lane.b32.xlu0 %v616, 64
    %v619 = vpop.permute.xlu0 %618
    %v621 = vmul.f32 %v603, %v619
    %vm622 = vcmp.gt.s32.totalorder %v361, 1
    %v623 = vsel %vm622, 1, 0
    %v624 = vcvt.s32.f32 %v623
    %vm625 = vcmp.gt.s32.totalorder %v361, 6
    %v626 = vsel %vm625, 1, 0
    %v627 = vcvt.s32.f32 %v626
    %v629 = vrot.slane %v627, 4
    %v631 = vsel %vm376, %v624, %v629
    %633 = vset.pattern.permute.xlu0 0
    %634 = vperm.xlu0 %633, %v631
    %v635 = vpop.permute.xlu0 %634
    %v637 = vmul.f32 %v635, %v621
    %v638 = vsub.f32 1.0, %v631
    %640 = vset.pattern.permute.xlu0 0
    %641 = vperm.xlu0 %640, %v638
    %v642 = vpop.permute.xlu0 %641
    %v644 = vmul.f32 %v642, %v503
    %v645 = vadd.f32 %v637, %v644
    %v646 = vmul.f32 %v635, %v615
    %v647 = vmul.f32 %v642, %v505
    %v648 = vadd.f32 %v646, %v647
    %v649 = vsel %vm376, %v350, %v359
    %v650 = vmul.f32 %v645, %v374
    %v651 = vmul.f32 %v645, %v375
    %653 = vrot.lane.b32.xlu0 %v650, 32
    %v654 = vpop.permute.xlu0 %653
    %657 = vrot.lane.b32.xlu0 %v651, 64
    %v658 = vpop.permute.xlu0 %657
    %v660 = vsel %vm136, %v654, %v658
    %v662 = vsel %vm381, %v660, 0
    %664 = vmatprep.subr.mxu0 0.0
    %665 = vmatpush1.msra.mxu0 0.0
    %666 = vmatprep.subr.mxu0 0.0
    %667 = vmatpush1.msra.mxu0 0.0
    %668 = vmatprep.subr.mxu0 0.0
    %669 = vmatpush1.msra.mxu0 0.0
    %670 = vmatprep.subr.mxu0 0.0
    %671 = vmatpush1.msra.mxu0 0.0
    %672 = vmatprep.subr.mxu0 0.0
    %673 = vmatpush1.msra.mxu0 0.0
    %674 = vmatprep.subr.mxu0 0.0
    %675 = vmatpush1.msra.mxu0 0.0
    %676 = vmatprep.subr.mxu0 0.0
    %677 = vmatpush1.msra.mxu0 0.0
    %678 = vmatprep.subr.mxu0 0.0
    %679 = vmatpush1.msra.mxu0 0.0
    %680 = vmatprep.subr.mxu0 0.0
    %681 = vmatpush1.msra.mxu0 %v369
    %682 = vmatprep.subr.mxu0 0.0
    %683 = vmatpush1.msra.mxu0 %v368
    %684 = vmatprep.subr.mxu0 0.0
    %685 = vmatpush1.msra.mxu0 %v367
    %686 = vmatprep.subr.mxu0 0.0
    %687 = vmatpush1.msra.mxu0 %v366
    %688 = vmatprep.subr.mxu0 0.0
    %689 = vmatpush1.msra.mxu0 %v365
    %690 = vmatprep.subr.mxu0 0.0
    %691 = vmatpush1.msra.mxu0 %v364
    %692 = vmatprep.subr.mxu0 0.0
    %693 = vmatpush1.msra.mxu0 %v363
    %694 = vmatprep.subr.mxu0 0.0
    %695 = vmatpush1.msra.mxu0 %v362
    %696 = vmatprep.subr.mxu0 0.0
    %697 = vmatpush2.msra.mxu0 0.0
    %698 = vmatprep.subr.mxu0 0.0
    %699 = vmatpush2.msra.mxu0 0.0
    %700 = vmatprep.subr.mxu0 0.0
    %701 = vmatpush2.msra.mxu0 0.0
    %702 = vmatprep.subr.mxu0 0.0
    %703 = vmatpush2.msra.mxu0 0.0
    %704 = vmatprep.subr.mxu0 0.0
    %705 = vmatpush2.msra.mxu0 0.0
    %706 = vmatprep.subr.mxu0 0.0
    %707 = vmatpush2.msra.mxu0 0.0
    %708 = vmatprep.subr.mxu0 0.0
    %709 = vmatpush2.msra.mxu0 0.0
    %710 = vmatprep.subr.mxu0 0.0
    %711 = vmatpush2.msra.mxu0 0.0
    %712 = vmatprep.subr.mxu0 0.0
    %713 = vmatpush2.msra.mxu0 0.0
    %714 = vmatprep.subr.mxu0 0.0
    %715 = vmatpush2.msra.mxu0 0.0
    %716 = vmatprep.subr.mxu0 0.0
    %717 = vmatpush2.msra.mxu0 0.0
    %718 = vmatprep.subr.mxu0 0.0
    %719 = vmatpush2.msra.mxu0 0.0
    %720 = vmatprep.subr.mxu0 0.0
    %721 = vmatpush2.msra.mxu0 0.0
    %722 = vmatprep.subr.mxu0 0.0
    %723 = vmatpush2.msra.mxu0 0.0
    %724 = vmatprep.subr.mxu0 0.0
    %725 = vmatpush2.msra.mxu0 0.0
    %726 = vmatprep.subr.mxu0 0.0
    %727 = vmatpush2.msra.mxu0 0.0
    %728 = vmatprep.mubr.f32.mxu0 0.0
    %729 = vmatmul.mubr.f32.gmra.mxu0 %v662
    %v730 = vpop.f32.mrf.mxu0
    %v731 = vadd.f32 0.0, %v730
    %v732 = vpop.f32.mrf.mxu0
    %733 = vdwg.mxu0
    %v734 = vadd.f32 %v649, %v731
    %v735 = vsub.f32 0.0, %v734
    %v736 = vmul.f32 %v735, 1.442695
    %v737 = vpow.pop %v736
    %v738 = vadd.f32 %v737, 1.0
    %v739 = vrcp.pop %v738
    %v740 = vmul.f32 1.0, %v739
    %v741 = vtanh.pop %v734
    %v742 = vmul.f32 %v740, %v648
    %744 = vrot.lane.b32.xlu0 %v741, 64
    %v745 = vpop.permute.xlu0 %744
    %v747 = vmul.f32 %v740, %v745
    %749 = vrot.lane.b32.xlu0 %v747, 32
    %v750 = vpop.permute.xlu0 %749
    %v752 = vadd.f32 %v742, %v750
    %v753 = vtanh.pop %v752
    %755 = vrot.lane.b32.xlu0 %v753, 64
    %v756 = vpop.permute.xlu0 %755
    %v758 = vmul.f32 %v740, %v756
    %vm759 = vcmp.gt.s32.totalorder %v361, 2
    %v760 = vsel %vm759, 1, 0
    %v761 = vcvt.s32.f32 %v760
    %vm762 = vcmp.gt.s32.totalorder %v361, 5
    %v763 = vsel %vm762, 1, 0
    %v764 = vcvt.s32.f32 %v763
    %v766 = vrot.slane %v764, 4
    %v768 = vsel %vm376, %v761, %v766
    %770 = vset.pattern.permute.xlu0 0
    %771 = vperm.xlu0 %770, %v768
    %v772 = vpop.permute.xlu0 %771
    %v774 = vmul.f32 %v772, %v758
    %v775 = vsub.f32 1.0, %v768
    %777 = vset.pattern.permute.xlu0 0
    %778 = vperm.xlu0 %777, %v775
    %v779 = vpop.permute.xlu0 %778
    %v781 = vmul.f32 %v779, %v645
    %v782 = vadd.f32 %v774, %v781
    %v783 = vmul.f32 %v772, %v752
    %v784 = vmul.f32 %v779, %v648
    %v785 = vadd.f32 %v783, %v784
    %v787 = vrot.slane %v350, 4
    %v790 = vrot.slane %v359, 4
    %v792 = vsel %vm376, %v787, %v790
    %v793 = vmul.f32 %v782, %v374
    %v794 = vmul.f32 %v782, %v375
    %796 = vrot.lane.b32.xlu0 %v793, 32
    %v797 = vpop.permute.xlu0 %796
    %800 = vrot.lane.b32.xlu0 %v794, 64
    %v801 = vpop.permute.xlu0 %800
    %v803 = vsel %vm136, %v797, %v801
    %v805 = vsel %vm381, %v803, 0
    %807 = vmatprep.subr.mxu0 0.0
    %808 = vmatpush1.msra.mxu0 0.0
    %809 = vmatprep.subr.mxu0 0.0
    %810 = vmatpush1.msra.mxu0 0.0
    %811 = vmatprep.subr.mxu0 0.0
    %812 = vmatpush1.msra.mxu0 0.0
    %813 = vmatprep.subr.mxu0 0.0
    %814 = vmatpush1.msra.mxu0 0.0
    %815 = vmatprep.subr.mxu0 0.0
    %816 = vmatpush1.msra.mxu0 0.0
    %817 = vmatprep.subr.mxu0 0.0
    %818 = vmatpush1.msra.mxu0 0.0
    %819 = vmatprep.subr.mxu0 0.0
    %820 = vmatpush1.msra.mxu0 0.0
    %821 = vmatprep.subr.mxu0 0.0
    %822 = vmatpush1.msra.mxu0 0.0
    %823 = vmatprep.subr.mxu0 0.0
    %824 = vmatpush1.msra.mxu0 %v369
    %825 = vmatprep.subr.mxu0 0.0
    %826 = vmatpush1.msra.mxu0 %v368
    %827 = vmatprep.subr.mxu0 0.0
    %828 = vmatpush1.msra.mxu0 %v367
    %829 = vmatprep.subr.mxu0 0.0
    %830 = vmatpush1.msra.mxu0 %v366
    %831 = vmatprep.subr.mxu0 0.0
    %832 = vmatpush1.msra.mxu0 %v365
    %833 = vmatprep.subr.mxu0 0.0
    %834 = vmatpush1.msra.mxu0 %v364
    %835 = vmatprep.subr.mxu0 0.0
    %836 = vmatpush1.msra.mxu0 %v363
    %837 = vmatprep.subr.mxu0 0.0
    %838 = vmatpush1.msra.mxu0 %v362
    %839 = vmatprep.subr.mxu0 0.0
    %840 = vmatpush2.msra.mxu0 0.0
    %841 = vmatprep.subr.mxu0 0.0
    %842 = vmatpush2.msra.mxu0 0.0
    %843 = vmatprep.subr.mxu0 0.0
    %844 = vmatpush2.msra.mxu0 0.0
    %845 = vmatprep.subr.mxu0 0.0
    %846 = vmatpush2.msra.mxu0 0.0
    %847 = vmatprep.subr.mxu0 0.0
    %848 = vmatpush2.msra.mxu0 0.0
    %849 = vmatprep.subr.mxu0 0.0
    %850 = vmatpush2.msra.mxu0 0.0
    %851 = vmatprep.subr.mxu0 0.0
    %852 = vmatpush2.msra.mxu0 0.0
    %853 = vmatprep.subr.mxu0 0.0
    %854 = vmatpush2.msra.mxu0 0.0
    %855 = vmatprep.subr.mxu0 0.0
    %856 = vmatpush2.msra.mxu0 0.0
    %857 = vmatprep.subr.mxu0 0.0
    %858 = vmatpush2.msra.mxu0 0.0
    %859 = vmatprep.subr.mxu0 0.0
    %860 = vmatpush2.msra.mxu0 0.0
    %861 = vmatprep.subr.mxu0 0.0
    %862 = vmatpush2.msra.mxu0 0.0
    %863 = vmatprep.subr.mxu0 0.0
    %864 = vmatpush2.msra.mxu0 0.0
    %865 = vmatprep.subr.mxu0 0.0
    %866 = vmatpush2.msra.mxu0 0.0
    %867 = vmatprep.subr.mxu0 0.0
    %868 = vmatpush2.msra.mxu0 0.0
    %869 = vmatprep.subr.mxu0 0.0
    %870 = vmatpush2.msra.mxu0 0.0
    %871 = vmatprep.mubr.f32.mxu0 0.0
    %872 = vmatmul.mubr.f32.gmra.mxu0 %v805
    %v873 = vpop.f32.mrf.mxu0
    %v874 = vadd.f32 0.0, %v873
    %v875 = vpop.f32.mrf.mxu0
    %876 = vdwg.mxu0
    %v877 = vadd.f32 %v792, %v874
    %v878 = vsub.f32 0.0, %v877
    %v879 = vmul.f32 %v878, 1.442695
    %v880 = vpow.pop %v879
    %v881 = vadd.f32 %v880, 1.0
    %v882 = vrcp.pop %v881
    %v883 = vmul.f32 1.0, %v882
    %v884 = vtanh.pop %v877
    %v885 = vmul.f32 %v883, %v785
    %887 = vrot.lane.b32.xlu0 %v884, 64
    %v888 = vpop.permute.xlu0 %887
    %v890 = vmul.f32 %v883, %v888
    %892 = vrot.lane.b32.xlu0 %v890, 32
    %v893 = vpop.permute.xlu0 %892
    %v895 = vadd.f32 %v885, %v893
    %v896 = vtanh.pop %v895
    %898 = vrot.lane.b32.xlu0 %v896, 64
    %v899 = vpop.permute.xlu0 %898
    %v901 = vmul.f32 %v883, %v899
    %vm902 = vcmp.gt.s32.totalorder %v361, 3
    %v903 = vsel %vm902, 1, 0
    %v904 = vcvt.s32.f32 %v903
    %vm905 = vcmp.gt.s32.totalorder %v361, 4
    %v906 = vsel %vm905, 1, 0
    %v907 = vcvt.s32.f32 %v906
    %v909 = vrot.slane %v907, 4
    %v911 = vsel %vm376, %v904, %v909
    %913 = vset.pattern.permute.xlu0 0
    %914 = vperm.xlu0 %913, %v911
    %v915 = vpop.permute.xlu0 %914
    %v917 = vmul.f32 %v915, %v901
    %v918 = vsub.f32 1.0, %v911
    %920 = vset.pattern.permute.xlu0 0
    %921 = vperm.xlu0 %920, %v918
    %v922 = vpop.permute.xlu0 %921
    %v924 = vmul.f32 %v922, %v782
    %v925 = vadd.f32 %v917, %v924
    %v926 = vmul.f32 %v915, %v895
    %v927 = vmul.f32 %v922, %v785
    %v928 = vadd.f32 %v926, %v927
    %v929 = vsel %vm376, %v351, %v358
    %v930 = vmul.f32 %v925, %v374
    %v931 = vmul.f32 %v925, %v375
    %933 = vrot.lane.b32.xlu0 %v930, 32
    %v934 = vpop.permute.xlu0 %933
    %937 = vrot.lane.b32.xlu0 %v931, 64
    %v938 = vpop.permute.xlu0 %937
    %v940 = vsel %vm136, %v934, %v938
    %v942 = vsel %vm381, %v940, 0
    %944 = vmatprep.subr.mxu0 0.0
    %945 = vmatpush1.msra.mxu0 0.0
    %946 = vmatprep.subr.mxu0 0.0
    %947 = vmatpush1.msra.mxu0 0.0
    %948 = vmatprep.subr.mxu0 0.0
    %949 = vmatpush1.msra.mxu0 0.0
    %950 = vmatprep.subr.mxu0 0.0
    %951 = vmatpush1.msra.mxu0 0.0
    %952 = vmatprep.subr.mxu0 0.0
    %953 = vmatpush1.msra.mxu0 0.0
    %954 = vmatprep.subr.mxu0 0.0
    %955 = vmatpush1.msra.mxu0 0.0
    %956 = vmatprep.subr.mxu0 0.0
    %957 = vmatpush1.msra.mxu0 0.0
    %958 = vmatprep.subr.mxu0 0.0
    %959 = vmatpush1.msra.mxu0 0.0
    %960 = vmatprep.subr.mxu0 0.0
    %961 = vmatpush1.msra.mxu0 %v369
    %962 = vmatprep.subr.mxu0 0.0
    %963 = vmatpush1.msra.mxu0 %v368
    %964 = vmatprep.subr.mxu0 0.0
    %965 = vmatpush1.msra.mxu0 %v367
    %966 = vmatprep.subr.mxu0 0.0
    %967 = vmatpush1.msra.mxu0 %v366
    %968 = vmatprep.subr.mxu0 0.0
    %969 = vmatpush1.msra.mxu0 %v365
    %970 = vmatprep.subr.mxu0 0.0
    %971 = vmatpush1.msra.mxu0 %v364
    %972 = vmatprep.subr.mxu0 0.0
    %973 = vmatpush1.msra.mxu0 %v363
    %974 = vmatprep.subr.mxu0 0.0
    %975 = vmatpush1.msra.mxu0 %v362
    %976 = vmatprep.subr.mxu0 0.0
    %977 = vmatpush2.msra.mxu0 0.0
    %978 = vmatprep.subr.mxu0 0.0
    %979 = vmatpush2.msra.mxu0 0.0
    %980 = vmatprep.subr.mxu0 0.0
    %981 = vmatpush2.msra.mxu0 0.0
    %982 = vmatprep.subr.mxu0 0.0
    %983 = vmatpush2.msra.mxu0 0.0
    %984 = vmatprep.subr.mxu0 0.0
    %985 = vmatpush2.msra.mxu0 0.0
    %986 = vmatprep.subr.mxu0 0.0
    %987 = vmatpush2.msra.mxu0 0.0
    %988 = vmatprep.subr.mxu0 0.0
    %989 = vmatpush2.msra.mxu0 0.0
    %990 = vmatprep.subr.mxu0 0.0
    %991 = vmatpush2.msra.mxu0 0.0
    %992 = vmatprep.subr.mxu0 0.0
    %993 = vmatpush2.msra.mxu0 0.0
    %994 = vmatprep.subr.mxu0 0.0
    %995 = vmatpush2.msra.mxu0 0.0
    %996 = vmatprep.subr.mxu0 0.0
    %997 = vmatpush2.msra.mxu0 0.0
    %998 = vmatprep.subr.mxu0 0.0
    %999 = vmatpush2.msra.mxu0 0.0
    %1000 = vmatprep.subr.mxu0 0.0
    %1001 = vmatpush2.msra.mxu0 0.0
    %1002 = vmatprep.subr.mxu0 0.0
    %1003 = vmatpush2.msra.mxu0 0.0
    %1004 = vmatprep.subr.mxu0 0.0
    %1005 = vmatpush2.msra.mxu0 0.0
    %1006 = vmatprep.subr.mxu0 0.0
    %1007 = vmatpush2.msra.mxu0 0.0
    %1008 = vmatprep.mubr.f32.mxu0 0.0
    %1009 = vmatmul.mubr.f32.gmra.mxu0 %v942
    %v1010 = vpop.f32.mrf.mxu0
    %v1011 = vadd.f32 0.0, %v1010
    %v1012 = vpop.f32.mrf.mxu0
    %1013 = vdwg.mxu0
    %v1014 = vadd.f32 %v929, %v1011
    %v1015 = vsub.f32 0.0, %v1014
    %v1016 = vmul.f32 %v1015, 1.442695
    %v1017 = vpow.pop %v1016
    %v1018 = vadd.f32 %v1017, 1.0
    %v1019 = vrcp.pop %v1018
    %v1020 = vmul.f32 1.0, %v1019
    %v1021 = vtanh.pop %v1014
    %v1022 = vmul.f32 %v1020, %v928
    %1024 = vrot.lane.b32.xlu0 %v1021, 64
    %v1025 = vpop.permute.xlu0 %1024
    %v1027 = vmul.f32 %v1020, %v1025
    %1029 = vrot.lane.b32.xlu0 %v1027, 32
    %v1030 = vpop.permute.xlu0 %1029
    %v1032 = vadd.f32 %v1022, %v1030
    %v1033 = vtanh.pop %v1032
    %1035 = vrot.lane.b32.xlu0 %v1033, 64
    %v1036 = vpop.permute.xlu0 %1035
    %v1038 = vmul.f32 %v1020, %v1036
    %v1040 = vrot.slane %v904, 4
    %v1042 = vsel %vm376, %v907, %v1040
    %1044 = vset.pattern.permute.xlu0 0
    %1045 = vperm.xlu0 %1044, %v1042
    %v1046 = vpop.permute.xlu0 %1045
    %v1048 = vmul.f32 %v1046, %v1038
    %v1049 = vsub.f32 1.0, %v1042
    %1051 = vset.pattern.permute.xlu0 0
    %1052 = vperm.xlu0 %1051, %v1049
    %v1053 = vpop.permute.xlu0 %1052
    %v1055 = vmul.f32 %v1053, %v925
    %v1056 = vadd.f32 %v1048, %v1055
    %v1057 = vmul.f32 %v1046, %v1032
    %v1058 = vmul.f32 %v1053, %v928
    %v1059 = vadd.f32 %v1057, %v1058
    %v1061 = vrot.slane %v351, 4
    %v1064 = vrot.slane %v358, 4
    %v1066 = vsel %vm376, %v1061, %v1064
    %v1067 = vmul.f32 %v1056, %v374
    %v1068 = vmul.f32 %v1056, %v375
    %1070 = vrot.lane.b32.xlu0 %v1067, 32
    %v1071 = vpop.permute.xlu0 %1070
    %1074 = vrot.lane.b32.xlu0 %v1068, 64
    %v1075 = vpop.permute.xlu0 %1074
    %v1077 = vsel %vm136, %v1071, %v1075
    %v1079 = vsel %vm381, %v1077, 0
    %1081 = vmatprep.subr.mxu0 0.0
    %1082 = vmatpush1.msra.mxu0 0.0
    %1083 = vmatprep.subr.mxu0 0.0
    %1084 = vmatpush1.msra.mxu0 0.0
    %1085 = vmatprep.subr.mxu0 0.0
    %1086 = vmatpush1.msra.mxu0 0.0
    %1087 = vmatprep.subr.mxu0 0.0
    %1088 = vmatpush1.msra.mxu0 0.0
    %1089 = vmatprep.subr.mxu0 0.0
    %1090 = vmatpush1.msra.mxu0 0.0
    %1091 = vmatprep.subr.mxu0 0.0
    %1092 = vmatpush1.msra.mxu0 0.0
    %1093 = vmatprep.subr.mxu0 0.0
    %1094 = vmatpush1.msra.mxu0 0.0
    %1095 = vmatprep.subr.mxu0 0.0
    %1096 = vmatpush1.msra.mxu0 0.0
    %1097 = vmatprep.subr.mxu0 0.0
    %1098 = vmatpush1.msra.mxu0 %v369
    %1099 = vmatprep.subr.mxu0 0.0
    %1100 = vmatpush1.msra.mxu0 %v368
    %1101 = vmatprep.subr.mxu0 0.0
    %1102 = vmatpush1.msra.mxu0 %v367
    %1103 = vmatprep.subr.mxu0 0.0
    %1104 = vmatpush1.msra.mxu0 %v366
    %1105 = vmatprep.subr.mxu0 0.0
    %1106 = vmatpush1.msra.mxu0 %v365
    %1107 = vmatprep.subr.mxu0 0.0
    %1108 = vmatpush1.msra.mxu0 %v364
    %1109 = vmatprep.subr.mxu0 0.0
    %1110 = vmatpush1.msra.mxu0 %v363
    %1111 = vmatprep.subr.mxu0 0.0
    %1112 = vmatpush1.msra.mxu0 %v362
    %1113 = vmatprep.subr.mxu0 0.0
    %1114 = vmatpush2.msra.mxu0 0.0
    %1115 = vmatprep.subr.mxu0 0.0
    %1116 = vmatpush2.msra.mxu0 0.0
    %1117 = vmatprep.subr.mxu0 0.0
    %1118 = vmatpush2.msra.mxu0 0.0
    %1119 = vmatprep.subr.mxu0 0.0
    %1120 = vmatpush2.msra.mxu0 0.0
    %1121 = vmatprep.subr.mxu0 0.0
    %1122 = vmatpush2.msra.mxu0 0.0
    %1123 = vmatprep.subr.mxu0 0.0
    %1124 = vmatpush2.msra.mxu0 0.0
    %1125 = vmatprep.subr.mxu0 0.0
    %1126 = vmatpush2.msra.mxu0 0.0
    %1127 = vmatprep.subr.mxu0 0.0
    %1128 = vmatpush2.msra.mxu0 0.0
    %1129 = vmatprep.subr.mxu0 0.0
    %1130 = vmatpush2.msra.mxu0 0.0
    %1131 = vmatprep.subr.mxu0 0.0
    %1132 = vmatpush2.msra.mxu0 0.0
    %1133 = vmatprep.subr.mxu0 0.0
    %1134 = vmatpush2.msra.mxu0 0.0
    %1135 = vmatprep.subr.mxu0 0.0
    %1136 = vmatpush2.msra.mxu0 0.0
    %1137 = vmatprep.subr.mxu0 0.0
    %1138 = vmatpush2.msra.mxu0 0.0
    %1139 = vmatprep.subr.mxu0 0.0
    %1140 = vmatpush2.msra.mxu0 0.0
    %1141 = vmatprep.subr.mxu0 0.0
    %1142 = vmatpush2.msra.mxu0 0.0
    %1143 = vmatprep.subr.mxu0 0.0
    %1144 = vmatpush2.msra.mxu0 0.0
    %1145 = vmatprep.mubr.f32.mxu0 0.0
    %1146 = vmatmul.mubr.f32.gmra.mxu0 %v1079
    %v1147 = vpop.f32.mrf.mxu0
    %v1148 = vadd.f32 0.0, %v1147
    %v1149 = vpop.f32.mrf.mxu0
    %1150 = vdwg.mxu0
    %v1151 = vadd.f32 %v1066, %v1148
    %v1152 = vsub.f32 0.0, %v1151
    %v1153 = vmul.f32 %v1152, 1.442695
    %v1154 = vpow.pop %v1153
    %v1155 = vadd.f32 %v1154, 1.0
    %v1156 = vrcp.pop %v1155
    %v1157 = vmul.f32 1.0, %v1156
    %v1158 = vtanh.pop %v1151
    %v1159 = vmul.f32 %v1157, %v1059
    %1161 = vrot.lane.b32.xlu0 %v1158, 64
    %v1162 = vpop.permute.xlu0 %1161
    %v1164 = vmul.f32 %v1157, %v1162
    %1166 = vrot.lane.b32.xlu0 %v1164, 32
    %v1167 = vpop.permute.xlu0 %1166
    %v1169 = vadd.f32 %v1159, %v1167
    %v1170 = vtanh.pop %v1169
    %1172 = vrot.lane.b32.xlu0 %v1170, 64
    %v1173 = vpop.permute.xlu0 %1172
    %v1175 = vmul.f32 %v1157, %v1173
    %v1177 = vrot.slane %v761, 4
    %v1179 = vsel %vm376, %v764, %v1177
    %1181 = vset.pattern.permute.xlu0 0
    %1182 = vperm.xlu0 %1181, %v1179
    %v1183 = vpop.permute.xlu0 %1182
    %v1185 = vmul.f32 %v1183, %v1175
    %v1186 = vsub.f32 1.0, %v1179
    %1188 = vset.pattern.permute.xlu0 0
    %1189 = vperm.xlu0 %1188, %v1186
    %v1190 = vpop.permute.xlu0 %1189
    %v1192 = vmul.f32 %v1190, %v1056
    %v1193 = vadd.f32 %v1185, %v1192
    %v1194 = vmul.f32 %v1183, %v1169
    %v1195 = vmul.f32 %v1190, %v1059
    %v1196 = vadd.f32 %v1194, %v1195
    %v1197 = vsel %vm376, %v352, %v357
    %v1198 = vmul.f32 %v1193, %v374
    %v1199 = vmul.f32 %v1193, %v375
    %1201 = vrot.lane.b32.xlu0 %v1198, 32
    %v1202 = vpop.permute.xlu0 %1201
    %1205 = vrot.lane.b32.xlu0 %v1199, 64
    %v1206 = vpop.permute.xlu0 %1205
    %v1208 = vsel %vm136, %v1202, %v1206
    %v1210 = vsel %vm381, %v1208, 0
    %1212 = vmatprep.subr.mxu0 0.0
    %1213 = vmatpush1.msra.mxu0 0.0
    %1214 = vmatprep.subr.mxu0 0.0
    %1215 = vmatpush1.msra.mxu0 0.0
    %1216 = vmatprep.subr.mxu0 0.0
    %1217 = vmatpush1.msra.mxu0 0.0
    %1218 = vmatprep.subr.mxu0 0.0
    %1219 = vmatpush1.msra.mxu0 0.0
    %1220 = vmatprep.subr.mxu0 0.0
    %1221 = vmatpush1.msra.mxu0 0.0
    %1222 = vmatprep.subr.mxu0 0.0
    %1223 = vmatpush1.msra.mxu0 0.0
    %1224 = vmatprep.subr.mxu0 0.0
    %1225 = vmatpush1.msra.mxu0 0.0
    %1226 = vmatprep.subr.mxu0 0.0
    %1227 = vmatpush1.msra.mxu0 0.0
    %1228 = vmatprep.subr.mxu0 0.0
    %1229 = vmatpush1.msra.mxu0 %v369
    %1230 = vmatprep.subr.mxu0 0.0
    %1231 = vmatpush1.msra.mxu0 %v368
    %1232 = vmatprep.subr.mxu0 0.0
    %1233 = vmatpush1.msra.mxu0 %v367
    %1234 = vmatprep.subr.mxu0 0.0
    %1235 = vmatpush1.msra.mxu0 %v366
    %1236 = vmatprep.subr.mxu0 0.0
    %1237 = vmatpush1.msra.mxu0 %v365
    %1238 = vmatprep.subr.mxu0 0.0
    %1239 = vmatpush1.msra.mxu0 %v364
    %1240 = vmatprep.subr.mxu0 0.0
    %1241 = vmatpush1.msra.mxu0 %v363
    %1242 = vmatprep.subr.mxu0 0.0
    %1243 = vmatpush1.msra.mxu0 %v362
    %1244 = vmatprep.subr.mxu0 0.0
    %1245 = vmatpush2.msra.mxu0 0.0
    %1246 = vmatprep.subr.mxu0 0.0
    %1247 = vmatpush2.msra.mxu0 0.0
    %1248 = vmatprep.subr.mxu0 0.0
    %1249 = vmatpush2.msra.mxu0 0.0
    %1250 = vmatprep.subr.mxu0 0.0
    %1251 = vmatpush2.msra.mxu0 0.0
    %1252 = vmatprep.subr.mxu0 0.0
    %1253 = vmatpush2.msra.mxu0 0.0
    %1254 = vmatprep.subr.mxu0 0.0
    %1255 = vmatpush2.msra.mxu0 0.0
    %1256 = vmatprep.subr.mxu0 0.0
    %1257 = vmatpush2.msra.mxu0 0.0
    %1258 = vmatprep.subr.mxu0 0.0
    %1259 = vmatpush2.msra.mxu0 0.0
    %1260 = vmatprep.subr.mxu0 0.0
    %1261 = vmatpush2.msra.mxu0 0.0
    %1262 = vmatprep.subr.mxu0 0.0
    %1263 = vmatpush2.msra.mxu0 0.0
    %1264 = vmatprep.subr.mxu0 0.0
    %1265 = vmatpush2.msra.mxu0 0.0
    %1266 = vmatprep.subr.mxu0 0.0
    %1267 = vmatpush2.msra.mxu0 0.0
    %1268 = vmatprep.subr.mxu0 0.0
    %1269 = vmatpush2.msra.mxu0 0.0
    %1270 = vmatprep.subr.mxu0 0.0
    %1271 = vmatpush2.msra.mxu0 0.0
    %1272 = vmatprep.subr.mxu0 0.0
    %1273 = vmatpush2.msra.mxu0 0.0
    %1274 = vmatprep.subr.mxu0 0.0
    %1275 = vmatpush2.msra.mxu0 0.0
    %1276 = vmatprep.mubr.f32.mxu0 0.0
    %1277 = vmatmul.mubr.f32.gmra.mxu0 %v1210
    %v1278 = vpop.f32.mrf.mxu0
    %v1279 = vadd.f32 0.0, %v1278
    %v1280 = vpop.f32.mrf.mxu0
    %1281 = vdwg.mxu0
    %v1282 = vadd.f32 %v1197, %v1279
    %v1283 = vsub.f32 0.0, %v1282
    %v1284 = vmul.f32 %v1283, 1.442695
    %v1285 = vpow.pop %v1284
    %v1286 = vadd.f32 %v1285, 1.0
    %v1287 = vrcp.pop %v1286
    %v1288 = vmul.f32 1.0, %v1287
    %v1289 = vtanh.pop %v1282
    %v1290 = vmul.f32 %v1288, %v1196
    %1292 = vrot.lane.b32.xlu0 %v1289, 64
    %v1293 = vpop.permute.xlu0 %1292
    %v1295 = vmul.f32 %v1288, %v1293
    %1297 = vrot.lane.b32.xlu0 %v1295, 32
    %v1298 = vpop.permute.xlu0 %1297
    %v1300 = vadd.f32 %v1290, %v1298
    %v1301 = vtanh.pop %v1300
    %1303 = vrot.lane.b32.xlu0 %v1301, 64
    %v1304 = vpop.permute.xlu0 %1303
    %v1306 = vmul.f32 %v1288, %v1304
    %v1308 = vrot.slane %v624, 4
    %v1310 = vsel %vm376, %v627, %v1308
    %1312 = vset.pattern.permute.xlu0 0
    %1313 = vperm.xlu0 %1312, %v1310
    %v1314 = vpop.permute.xlu0 %1313
    %v1316 = vmul.f32 %v1314, %v1306
    %v1317 = vsub.f32 1.0, %v1310
    %1319 = vset.pattern.permute.xlu0 0
    %1320 = vperm.xlu0 %1319, %v1317
    %v1321 = vpop.permute.xlu0 %1320
    %v1323 = vmul.f32 %v1321, %v1193
    %v1324 = vadd.f32 %v1316, %v1323
    %v1325 = vmul.f32 %v1314, %v1300
    %v1326 = vmul.f32 %v1321, %v1196
    %v1327 = vadd.f32 %v1325, %v1326
    %v1329 = vrot.slane %v352, 4
    %v1332 = vrot.slane %v357, 4
    %v1334 = vsel %vm376, %v1329, %v1332
    %v1335 = vmul.f32 %v1324, %v374
    %v1336 = vmul.f32 %v1324, %v375
    %1338 = vrot.lane.b32.xlu0 %v1335, 32
    %v1339 = vpop.permute.xlu0 %1338
    %1342 = vrot.lane.b32.xlu0 %v1336, 64
    %v1343 = vpop.permute.xlu0 %1342
    %v1345 = vsel %vm136, %v1339, %v1343
    %v1347 = vsel %vm381, %v1345, 0
    %1349 = vmatprep.subr.mxu0 0.0
    %1350 = vmatpush1.msra.mxu0 0.0
    %1351 = vmatprep.subr.mxu0 0.0
    %1352 = vmatpush1.msra.mxu0 0.0
    %1353 = vmatprep.subr.mxu0 0.0
    %1354 = vmatpush1.msra.mxu0 0.0
    %1355 = vmatprep.subr.mxu0 0.0
    %1356 = vmatpush1.msra.mxu0 0.0
    %1357 = vmatprep.subr.mxu0 0.0
    %1358 = vmatpush1.msra.mxu0 0.0
    %1359 = vmatprep.subr.mxu0 0.0
    %1360 = vmatpush1.msra.mxu0 0.0
    %1361 = vmatprep.subr.mxu0 0.0
    %1362 = vmatpush1.msra.mxu0 0.0
    %1363 = vmatprep.subr.mxu0 0.0
    %1364 = vmatpush1.msra.mxu0 0.0
    %1365 = vmatprep.subr.mxu0 0.0
    %1366 = vmatpush1.msra.mxu0 %v369
    %1367 = vmatprep.subr.mxu0 0.0
    %1368 = vmatpush1.msra.mxu0 %v368
    %1369 = vmatprep.subr.mxu0 0.0
    %1370 = vmatpush1.msra.mxu0 %v367
    %1371 = vmatprep.subr.mxu0 0.0
    %1372 = vmatpush1.msra.mxu0 %v366
    %1373 = vmatprep.subr.mxu0 0.0
    %1374 = vmatpush1.msra.mxu0 %v365
    %1375 = vmatprep.subr.mxu0 0.0
    %1376 = vmatpush1.msra.mxu0 %v364
    %1377 = vmatprep.subr.mxu0 0.0
    %1378 = vmatpush1.msra.mxu0 %v363
    %1379 = vmatprep.subr.mxu0 0.0
    %1380 = vmatpush1.msra.mxu0 %v362
    %1381 = vmatprep.subr.mxu0 0.0
    %1382 = vmatpush2.msra.mxu0 0.0
    %1383 = vmatprep.subr.mxu0 0.0
    %1384 = vmatpush2.msra.mxu0 0.0
    %1385 = vmatprep.subr.mxu0 0.0
    %1386 = vmatpush2.msra.mxu0 0.0
    %1387 = vmatprep.subr.mxu0 0.0
    %1388 = vmatpush2.msra.mxu0 0.0
    %1389 = vmatprep.subr.mxu0 0.0
    %1390 = vmatpush2.msra.mxu0 0.0
    %1391 = vmatprep.subr.mxu0 0.0
    %1392 = vmatpush2.msra.mxu0 0.0
    %1393 = vmatprep.subr.mxu0 0.0
    %1394 = vmatpush2.msra.mxu0 0.0
    %1395 = vmatprep.subr.mxu0 0.0
    %1396 = vmatpush2.msra.mxu0 0.0
    %1397 = vmatprep.subr.mxu0 0.0
    %1398 = vmatpush2.msra.mxu0 0.0
    %1399 = vmatprep.subr.mxu0 0.0
    %1400 = vmatpush2.msra.mxu0 0.0
    %1401 = vmatprep.subr.mxu0 0.0
    %1402 = vmatpush2.msra.mxu0 0.0
    %1403 = vmatprep.subr.mxu0 0.0
    %1404 = vmatpush2.msra.mxu0 0.0
    %1405 = vmatprep.subr.mxu0 0.0
    %1406 = vmatpush2.msra.mxu0 0.0
    %1407 = vmatprep.subr.mxu0 0.0
    %1408 = vmatpush2.msra.mxu0 0.0
    %1409 = vmatprep.subr.mxu0 0.0
    %1410 = vmatpush2.msra.mxu0 0.0
    %1411 = vmatprep.subr.mxu0 0.0
    %1412 = vmatpush2.msra.mxu0 0.0
    %1413 = vmatprep.mubr.f32.mxu0 0.0
    %1414 = vmatmul.mubr.f32.gmra.mxu0 %v1347
    %v1415 = vpop.f32.mrf.mxu0
    %v1416 = vadd.f32 0.0, %v1415
    %v1417 = vpop.f32.mrf.mxu0
    %1418 = vdwg.mxu0
    %v1419 = vadd.f32 %v1334, %v1416
    %v1420 = vsub.f32 0.0, %v1419
    %v1421 = vmul.f32 %v1420, 1.442695
    %v1422 = vpow.pop %v1421
    %v1423 = vadd.f32 %v1422, 1.0
    %v1424 = vrcp.pop %v1423
    %v1425 = vmul.f32 1.0, %v1424
    %v1426 = vtanh.pop %v1419
    %v1427 = vmul.f32 %v1425, %v1327
    %1429 = vrot.lane.b32.xlu0 %v1426, 64
    %v1430 = vpop.permute.xlu0 %1429
    %v1432 = vmul.f32 %v1425, %v1430
    %1434 = vrot.lane.b32.xlu0 %v1432, 32
    %v1435 = vpop.permute.xlu0 %1434
    %v1437 = vadd.f32 %v1427, %v1435
    %v1438 = vtanh.pop %v1437
    %1440 = vrot.lane.b32.xlu0 %v1438, 64
    %v1441 = vpop.permute.xlu0 %1440
    %v1443 = vmul.f32 %v1425, %v1441
    %v1445 = vrot.slane %v482, 4
    %v1447 = vsel %vm376, %v485, %v1445
    %1449 = vset.pattern.permute.xlu0 0
    %1450 = vperm.xlu0 %1449, %v1447
    %v1451 = vpop.permute.xlu0 %1450
    %v1453 = vmul.f32 %v1451, %v1443
    %v1454 = vsub.f32 1.0, %v1447
    %1456 = vset.pattern.permute.xlu0 0
    %1457 = vperm.xlu0 %1456, %v1454
    %v1458 = vpop.permute.xlu0 %1457
    %v1460 = vmul.f32 %v1458, %v1324
    %v1461 = vadd.f32 %v1453, %v1460
    %1463 = vrot.lane.b32.xlu0 %v1461, 32
    %v1464 = vpop.permute.xlu0 %1463
    %v1466 = vrot.slane %v1461, 4
    %1467 = vrot.lane.b32.xlu0 %v1466, 64
    %v1468 = vpop.permute.xlu0 %1467
    %v1470 = vsel %vm136, %v1464, %v1468
    %v1471 = vld [vmem:[#allocation7] sm:$0xff]
    %v1472 = vld [vmem:[#allocation7 + $0x10] sm:$0xff]
    %v1473 = vld [vmem:[#allocation7 + $0x20] sm:$0xff]
    %v1474 = vld [vmem:[#allocation7 + $0x30] sm:$0xff]
    %v1475 = vld [vmem:[#allocation7 + $0x40] sm:$0xff]
    %v1476 = vld [vmem:[#allocation7 + $0x50] sm:$0xff]
    %v1477 = vld [vmem:[#allocation7 + $0x60] sm:$0xff]
    %v1478 = vld [vmem:[#allocation7 + $0x70] sm:$0xff]
    %v1479 = vld [vmem:[%s6 + $0x2] sm:$0x1]
    %v1480 = vld [vmem:[%s6 + $0x3] sm:$0x1]
    %v1481 = vld [vmem:[%s6 + $0x4] sm:$0x1]
    %v1482 = vlaneseq
    %v1483 = vshrl.u32 %v1482, 7
    %v1484 = vsub.s32 0, %v1483
    %v1485 = vrot.slane %v1479, %v1484
    %v1487 = vsel %vm381, %v1470, 0
    %1489 = vmatprep.subr.mxu0 0.0
    %1490 = vmatpush1.msra.mxu0 0.0
    %1491 = vmatprep.subr.mxu0 0.0
    %1492 = vmatpush1.msra.mxu0 0.0
    %1493 = vmatprep.subr.mxu0 0.0
    %1494 = vmatpush1.msra.mxu0 0.0
    %1495 = vmatprep.subr.mxu0 0.0
    %1496 = vmatpush1.msra.mxu0 0.0
    %1497 = vmatprep.subr.mxu0 0.0
    %1498 = vmatpush1.msra.mxu0 0.0
    %1499 = vmatprep.subr.mxu0 0.0
    %1500 = vmatpush1.msra.mxu0 0.0
    %1501 = vmatprep.subr.mxu0 0.0
    %1502 = vmatpush1.msra.mxu0 0.0
    %1503 = vmatprep.subr.mxu0 0.0
    %1504 = vmatpush1.msra.mxu0 0.0
    %1505 = vmatprep.subr.mxu0 0.0
    %1506 = vmatpush1.msra.mxu0 %v1478
    %1507 = vmatprep.subr.mxu0 0.0
    %1508 = vmatpush1.msra.mxu0 %v1477
    %1509 = vmatprep.subr.mxu0 0.0
    %1510 = vmatpush1.msra.mxu0 %v1476
    %1511 = vmatprep.subr.mxu0 0.0
    %1512 = vmatpush1.msra.mxu0 %v1475
    %1513 = vmatprep.subr.mxu0 0.0
    %1514 = vmatpush1.msra.mxu0 %v1474
    %1515 = vmatprep.subr.mxu0 0.0
    %1516 = vmatpush1.msra.mxu0 %v1473
    %1517 = vmatprep.subr.mxu0 0.0
    %1518 = vmatpush1.msra.mxu0 %v1472
    %1519 = vmatprep.subr.mxu0 0.0
    %1520 = vmatpush1.msra.mxu0 %v1471
    %1521 = vmatprep.subr.mxu0 0.0
    %1522 = vmatpush2.msra.mxu0 0.0
    %1523 = vmatprep.subr.mxu0 0.0
    %1524 = vmatpush2.msra.mxu0 0.0
    %1525 = vmatprep.subr.mxu0 0.0
    %1526 = vmatpush2.msra.mxu0 0.0
    %1527 = vmatprep.subr.mxu0 0.0
    %1528 = vmatpush2.msra.mxu0 0.0
    %1529 = vmatprep.subr.mxu0 0.0
    %1530 = vmatpush2.msra.mxu0 0.0
    %1531 = vmatprep.subr.mxu0 0.0
    %1532 = vmatpush2.msra.mxu0 0.0
    %1533 = vmatprep.subr.mxu0 0.0
    %1534 = vmatpush2.msra.mxu0 0.0
    %1535 = vmatprep.subr.mxu0 0.0
    %1536 = vmatpush2.msra.mxu0 0.0
    %1537 = vmatprep.subr.mxu0 0.0
    %1538 = vmatpush2.msra.mxu0 0.0
    %1539 = vmatprep.subr.mxu0 0.0
    %1540 = vmatpush2.msra.mxu0 0.0
    %1541 = vmatprep.subr.mxu0 0.0
    %1542 = vmatpush2.msra.mxu0 0.0
    %1543 = vmatprep.subr.mxu0 0.0
    %1544 = vmatpush2.msra.mxu0 0.0
    %1545 = vmatprep.subr.mxu0 0.0
    %1546 = vmatpush2.msra.mxu0 0.0
    %1547 = vmatprep.subr.mxu0 0.0
    %1548 = vmatpush2.msra.mxu0 0.0
    %1549 = vmatprep.subr.mxu0 0.0
    %1550 = vmatpush2.msra.mxu0 0.0
    %1551 = vmatprep.subr.mxu0 0.0
    %1552 = vmatpush2.msra.mxu0 0.0
    %1553 = vmatprep.mubr.f32.mxu0 0.0
    %1554 = vmatmul.mubr.f32.gmra.mxu0 %v1487
    %v1555 = vpop.f32.mrf.mxu0
    %v1556 = vadd.f32 %v1485, %v1555
    %v1557 = vpop.f32.mrf.mxu0
    %1558 = vdwg.mxu0
    %v1559 = vlaneseq
    %v1560 = vshrl.u32 %v1559, 7
    %v1561 = vsub.s32 0, %v1560
    %v1562 = vrot.slane %v1480, %v1561
    %v1563 = vmul.f32 %v1556, %v1562
    %v1564 = vlaneseq
    %v1565 = vshrl.u32 %v1564, 7
    %v1566 = vsub.s32 0, %v1565
    %v1567 = vrot.slane %v1481, %v1566
    %v1568 = vadd.f32 %v1563, %v1567
    %v1569 = vld [vmem:[%s6 + $0x5] sm:$0x1]
    %v1570 = vld [vmem:[%s6 + $0x6] sm:$0x1]
    %v1571 = vld [vmem:[%s6 + $0x7] sm:$0x1]
    %v1572 = vld [vmem:[%s6 + $0x8] sm:$0x1]
    %v1573 = vld [vmem:[%s6 + $0x9] sm:$0x1]
    %v1574 = vld [vmem:[%s6 + $0xa] sm:$0x1]
    %v1575 = vld [vmem:[#allocation7 + $0x8] sm:$0xff]
    %v1576 = vld [vmem:[#allocation7 + $0x18] sm:$0xff]
    %v1577 = vld [vmem:[#allocation7 + $0x28] sm:$0xff]
    %v1578 = vld [vmem:[#allocation7 + $0x38] sm:$0xff]
    %v1579 = vld [vmem:[#allocation7 + $0x48] sm:$0xff]
    %v1580 = vld [vmem:[#allocation7 + $0x58] sm:$0xff]
    %v1581 = vld [vmem:[#allocation7 + $0x68] sm:$0xff]
    %v1582 = vld [vmem:[#allocation7 + $0x78] sm:$0xff]
    %v1583 = vld [vmem:[#allocation8] sm:$0xff]
    %v1584 = vld [vmem:[#allocation8 + $0x8] sm:$0xff]
    %v1585 = vld [vmem:[%s8] sm:$0xff]
    %v1586 = vld [vmem:[%s8 + $0x8] sm:$0xff]
    %1588 = vset.pattern.permute.xlu0 0
    %1589 = vperm.xlu0 %1588, %v1585
    %v1590 = vpop.permute.xlu0 %1589
    %1593 = vset.pattern.permute.xlu0 0
    %1594 = vperm.xlu0 %1593, %v1586
    %v1595 = vpop.permute.xlu0 %1594
    %v1597 = vlaneseq
    %v1598 = vshrl.u32 %v1597, 7
    %v1599 = vsub.s32 0, %v1598
    %v1600 = vrot.slane %v1569, %v1599
    %v1601 = vmul.f32 %v1590, %v1600
    %v1602 = vmul.f32 %v1595, %v1600
    %v1603 = vlaneseq
    %v1604 = vshrl.u32 %v1603, 7
    %v1605 = vsub.s32 0, %v1604
    %v1606 = vrot.slane %v1570, %v1605
    %vm1607 = vcmask 130048
    %v1609 = vsel %vm1607, %v1583, 0
    %v1612 = vsel %vm1607, %v1584, 0
    %1614 = vmatprep.subr.mxu0 0.0
    %1615 = vmatpush1.msra.mxu0 0.0
    %1616 = vmatprep.subr.mxu0 0.0
    %1617 = vmatpush1.msra.mxu0 0.0
    %1618 = vmatprep.subr.mxu0 0.0
    %1619 = vmatpush1.msra.mxu0 0.0
    %1620 = vmatprep.subr.mxu0 0.0
    %1621 = vmatpush1.msra.mxu0 0.0
    %1622 = vmatprep.subr.mxu0 0.0
    %1623 = vmatpush1.msra.mxu0 0.0
    %1624 = vmatprep.subr.mxu0 0.0
    %1625 = vmatpush1.msra.mxu0 0.0
    %1626 = vmatprep.subr.mxu0 0.0
    %1627 = vmatpush1.msra.mxu0 0.0
    %1628 = vmatprep.subr.mxu0 0.0
    %1629 = vmatpush1.msra.mxu0 0.0
    %1630 = vmatprep.subr.mxu0 0.0
    %1631 = vmatpush1.msra.mxu0 0.0
    %1632 = vmatprep.subr.mxu0 0.0
    %1633 = vmatpush1.msra.mxu0 0.0
    %1634 = vmatprep.subr.mxu0 0.0
    %1635 = vmatpush1.msra.mxu0 0.0
    %1636 = vmatprep.subr.mxu0 0.0
    %1637 = vmatpush1.msra.mxu0 0.0
    %1638 = vmatprep.subr.mxu0 0.0
    %1639 = vmatpush1.msra.mxu0 0.0
    %1640 = vmatprep.subr.mxu0 0.0
    %1641 = vmatpush1.msra.mxu0 0.0
    %1642 = vmatprep.subr.mxu0 0.0
    %1643 = vmatpush1.msra.mxu0 %v1602
    %1644 = vmatprep.subr.mxu0 0.0
    %1645 = vmatpush1.msra.mxu0 %v1601
    %1646 = vmatprep.subr.mxu0 0.0
    %1647 = vmatpush2.msra.mxu0 0.0
    %1648 = vmatprep.subr.mxu0 0.0
    %1649 = vmatpush2.msra.mxu0 0.0
    %1650 = vmatprep.subr.mxu0 0.0
    %1651 = vmatpush2.msra.mxu0 0.0
    %1652 = vmatprep.subr.mxu0 0.0
    %1653 = vmatpush2.msra.mxu0 0.0
    %1654 = vmatprep.subr.mxu0 0.0
    %1655 = vmatpush2.msra.mxu0 0.0
    %1656 = vmatprep.subr.mxu0 0.0
    %1657 = vmatpush2.msra.mxu0 0.0
    %1658 = vmatprep.subr.mxu0 0.0
    %1659 = vmatpush2.msra.mxu0 0.0
    %1660 = vmatprep.subr.mxu0 0.0
    %1661 = vmatpush2.msra.mxu0 0.0
    %1662 = vmatprep.subr.mxu0 0.0
    %1663 = vmatpush2.msra.mxu0 0.0
    %1664 = vmatprep.subr.mxu0 0.0
    %1665 = vmatpush2.msra.mxu0 0.0
    %1666 = vmatprep.subr.mxu0 0.0
    %1667 = vmatpush2.msra.mxu0 0.0
    %1668 = vmatprep.subr.mxu0 0.0
    %1669 = vmatpush2.msra.mxu0 0.0
    %1670 = vmatprep.subr.mxu0 0.0
    %1671 = vmatpush2.msra.mxu0 0.0
    %1672 = vmatprep.subr.mxu0 0.0
    %1673 = vmatpush2.msra.mxu0 0.0
    %1674 = vmatprep.subr.mxu0 0.0
    %1675 = vmatpush2.msra.mxu0 0.0
    %1676 = vmatprep.subr.mxu0 0.0
    %1677 = vmatpush2.msra.mxu0 0.0
    %1678 = vmatprep.mubr.f32.mxu0 0.0
    %1679 = vmatmul.mubr.f32.gmra.mxu0 %v1609
    %v1680 = vpop.f32.mrf.mxu0
    %v1681 = vadd.f32 %v1606, %v1680
    %v1682 = vpop.f32.mrf.mxu0
    %1683 = vmatprep.mubr.f32.mxu0 0.0
    %1684 = vmatmul.mubr.f32.gmra.mxu0 %v1612
    %v1685 = vpop.f32.mrf.mxu0
    %v1686 = vadd.f32 %v1606, %v1685
    %v1687 = vpop.f32.mrf.mxu0
    %1688 = vdwg.mxu0
    %v1689 = vmax.f32 %v1681, 0.0
    %v1690 = vmax.f32 %v1686, 0.0
    %1699 = vrot.lane.b32.xlu0 %v1471, 64
    %v1700 = vpop.permute.xlu0 %1699
    %1701 = vrot.lane.b32.xlu0 %v1472, 64
    %v1702 = vpop.permute.xlu0 %1701
    %1703 = vrot.lane.b32.xlu0 %v1473, 64
    %v1704 = vpop.permute.xlu0 %1703
    %1705 = vrot.lane.b32.xlu0 %v1474, 64
    %v1706 = vpop.permute.xlu0 %1705
    %1707 = vrot.lane.b32.xlu0 %v1475, 64
    %v1708 = vpop.permute.xlu0 %1707
    %1709 = vrot.lane.b32.xlu0 %v1476, 64
    %v1710 = vpop.permute.xlu0 %1709
    %1711 = vrot.lane.b32.xlu0 %v1477, 64
    %v1712 = vpop.permute.xlu0 %1711
    %1713 = vrot.lane.b32.xlu0 %v1478, 64
    %v1714 = vpop.permute.xlu0 %1713
    %v1724 = vsel %vm381, %v1689, 0
    %v1727 = vsel %vm381, %v1690, 0
    %1729 = vmatprep.subr.mxu0 0.0
    %1730 = vmatpush1.msra.mxu0 0.0
    %1731 = vmatprep.subr.mxu0 0.0
    %1732 = vmatpush1.msra.mxu0 0.0
    %1733 = vmatprep.subr.mxu0 0.0
    %1734 = vmatpush1.msra.mxu0 0.0
    %1735 = vmatprep.subr.mxu0 0.0
    %1736 = vmatpush1.msra.mxu0 0.0
    %1737 = vmatprep.subr.mxu0 0.0
    %1738 = vmatpush1.msra.mxu0 0.0
    %1739 = vmatprep.subr.mxu0 0.0
    %1740 = vmatpush1.msra.mxu0 0.0
    %1741 = vmatprep.subr.mxu0 0.0
    %1742 = vmatpush1.msra.mxu0 0.0
    %1743 = vmatprep.subr.mxu0 0.0
    %1744 = vmatpush1.msra.mxu0 0.0
    %1745 = vmatprep.subr.mxu0 0.0
    %1746 = vmatpush1.msra.mxu0 %v1714
    %1747 = vmatprep.subr.mxu0 0.0
    %1748 = vmatpush1.msra.mxu0 %v1712
    %1749 = vmatprep.subr.mxu0 0.0
    %1750 = vmatpush1.msra.mxu0 %v1710
    %1751 = vmatprep.subr.mxu0 0.0
    %1752 = vmatpush1.msra.mxu0 %v1708
    %1753 = vmatprep.subr.mxu0 0.0
    %1754 = vmatpush1.msra.mxu0 %v1706
    %1755 = vmatprep.subr.mxu0 0.0
    %1756 = vmatpush1.msra.mxu0 %v1704
    %1757 = vmatprep.subr.mxu0 0.0
    %1758 = vmatpush1.msra.mxu0 %v1702
    %1759 = vmatprep.subr.mxu0 0.0
    %1760 = vmatpush1.msra.mxu0 %v1700
    %1761 = vmatprep.subr.mxu0 0.0
    %1762 = vmatpush2.msra.mxu0 0.0
    %1763 = vmatprep.subr.mxu0 0.0
    %1764 = vmatpush2.msra.mxu0 0.0
    %1765 = vmatprep.subr.mxu0 0.0
    %1766 = vmatpush2.msra.mxu0 0.0
    %1767 = vmatprep.subr.mxu0 0.0
    %1768 = vmatpush2.msra.mxu0 0.0
    %1769 = vmatprep.subr.mxu0 0.0
    %1770 = vmatpush2.msra.mxu0 0.0
    %1771 = vmatprep.subr.mxu0 0.0
    %1772 = vmatpush2.msra.mxu0 0.0
    %1773 = vmatprep.subr.mxu0 0.0
    %1774 = vmatpush2.msra.mxu0 0.0
    %1775 = vmatprep.subr.mxu0 0.0
    %1776 = vmatpush2.msra.mxu0 0.0
    %1777 = vmatprep.subr.mxu0 0.0
    %1778 = vmatpush2.msra.mxu0 0.0
    %1779 = vmatprep.subr.mxu0 0.0
    %1780 = vmatpush2.msra.mxu0 0.0
    %1781 = vmatprep.subr.mxu0 0.0
    %1782 = vmatpush2.msra.mxu0 0.0
    %1783 = vmatprep.subr.mxu0 0.0
    %1784 = vmatpush2.msra.mxu0 0.0
    %1785 = vmatprep.subr.mxu0 0.0
    %1786 = vmatpush2.msra.mxu0 0.0
    %1787 = vmatprep.subr.mxu0 0.0
    %1788 = vmatpush2.msra.mxu0 0.0
    %1789 = vmatprep.subr.mxu0 0.0
    %1790 = vmatpush2.msra.mxu0 0.0
    %1791 = vmatprep.subr.mxu0 0.0
    %1792 = vmatpush2.msra.mxu0 0.0
    %1793 = vmatprep.mubr.f32.mxu0 0.0
    %1794 = vmatmul.mubr.f32.gmra.mxu0 %v1724
    %v1795 = vpop.f32.mrf.mxu0
    %v1796 = vadd.f32 0.0, %v1795
    %v1797 = vpop.f32.mrf.mxu0
    %1798 = vmatprep.mubr.f32.mxu0 0.0
    %1799 = vmatmul.mubr.f32.gmra.mxu0 %v1727
    %v1800 = vpop.f32.mrf.mxu0
    %v1801 = vadd.f32 0.0, %v1800
    %v1802 = vpop.f32.mrf.mxu0
    %1803 = vdwg.mxu0
    %v1804 = vlaneseq
    %v1805 = vshrl.u32 %v1804, 7
    %v1806 = vsub.s32 0, %v1805
    %v1807 = vrot.slane %v1571, %v1806
    %1808 = vmatprep.subr.mxu0 0.0
    %1809 = vmatpush1.msra.mxu0 0.0
    %1810 = vmatprep.subr.mxu0 0.0
    %1811 = vmatpush1.msra.mxu0 0.0
    %1812 = vmatprep.subr.mxu0 0.0
    %1813 = vmatpush1.msra.mxu0 0.0
    %1814 = vmatprep.subr.mxu0 0.0
    %1815 = vmatpush1.msra.mxu0 0.0
    %1816 = vmatprep.subr.mxu0 0.0
    %1817 = vmatpush1.msra.mxu0 0.0
    %1818 = vmatprep.subr.mxu0 0.0
    %1819 = vmatpush1.msra.mxu0 0.0
    %1820 = vmatprep.subr.mxu0 0.0
    %1821 = vmatpush1.msra.mxu0 0.0
    %1822 = vmatprep.subr.mxu0 0.0
    %1823 = vmatpush1.msra.mxu0 0.0
    %1824 = vmatprep.subr.mxu0 0.0
    %1825 = vmatpush1.msra.mxu0 0.0
    %1826 = vmatprep.subr.mxu0 0.0
    %1827 = vmatpush1.msra.mxu0 0.0
    %1828 = vmatprep.subr.mxu0 0.0
    %1829 = vmatpush1.msra.mxu0 0.0
    %1830 = vmatprep.subr.mxu0 0.0
    %1831 = vmatpush1.msra.mxu0 0.0
    %1832 = vmatprep.subr.mxu0 0.0
    %1833 = vmatpush1.msra.mxu0 0.0
    %1834 = vmatprep.subr.mxu0 0.0
    %1835 = vmatpush1.msra.mxu0 0.0
    %1836 = vmatprep.subr.mxu0 0.0
    %1837 = vmatpush1.msra.mxu0 %v1801
    %1838 = vmatprep.subr.mxu0 0.0
    %1839 = vmatpush1.msra.mxu0 %v1796
    %1840 = vmatprep.subr.mxu0 0.0
    %1841 = vmatpush2.msra.mxu0 0.0
    %1842 = vmatprep.subr.mxu0 0.0
    %1843 = vmatpush2.msra.mxu0 0.0
    %1844 = vmatprep.subr.mxu0 0.0
    %1845 = vmatpush2.msra.mxu0 0.0
    %1846 = vmatprep.subr.mxu0 0.0
    %1847 = vmatpush2.msra.mxu0 0.0
    %1848 = vmatprep.subr.mxu0 0.0
    %1849 = vmatpush2.msra.mxu0 0.0
    %1850 = vmatprep.subr.mxu0 0.0
    %1851 = vmatpush2.msra.mxu0 0.0
    %1852 = vmatprep.subr.mxu0 0.0
    %1853 = vmatpush2.msra.mxu0 0.0
    %1854 = vmatprep.subr.mxu0 0.0
    %1855 = vmatpush2.msra.mxu0 0.0
    %1856 = vmatprep.subr.mxu0 0.0
    %1857 = vmatpush2.msra.mxu0 0.0
    %1858 = vmatprep.subr.mxu0 0.0
    %1859 = vmatpush2.msra.mxu0 0.0
    %1860 = vmatprep.subr.mxu0 0.0
    %1861 = vmatpush2.msra.mxu0 0.0
    %1862 = vmatprep.subr.mxu0 0.0
    %1863 = vmatpush2.msra.mxu0 0.0
    %1864 = vmatprep.subr.mxu0 0.0
    %1865 = vmatpush2.msra.mxu0 0.0
    %1866 = vmatprep.subr.mxu0 0.0
    %1867 = vmatpush2.msra.mxu0 0.0
    %1868 = vmatprep.subr.mxu0 0.0
    %1869 = vmatpush2.msra.mxu0 0.0
    %1870 = vmatprep.subr.mxu0 0.0
    %1871 = vmatpush2.msra.mxu0 0.0
    %1872 = vmatprep.mubr.f32.mxu0 0.0
    %1873 = vmatmul.mubr.f32.gmra.mxu0 %v1609
    %v1874 = vpop.f32.mrf.mxu0
    %v1875 = vadd.f32 %v1807, %v1874
    %v1876 = vpop.f32.mrf.mxu0
    %1877 = vmatprep.mubr.f32.mxu0 0.0
    %1878 = vmatmul.mubr.f32.gmra.mxu0 %v1612
    %v1879 = vpop.f32.mrf.mxu0
    %v1880 = vadd.f32 %v1807, %v1879
    %v1881 = vpop.f32.mrf.mxu0
    %1882 = vdwg.mxu0
    %v1883 = vmax.f32 %v1875, 0.0
    %v1884 = vmax.f32 %v1880, 0.0
    %v1885 = vld [vmem:[#allocation10] sm:$0xf]
    %v1887 = vsel %vm1607, %v1885, 0
    %1889 = vmatprep.subr.mxu0 0.0
    %1890 = vmatpush1.msra.mxu0 0.0
    %1891 = vmatprep.subr.mxu0 0.0
    %1892 = vmatpush1.msra.mxu0 0.0
    %1893 = vmatprep.subr.mxu0 0.0
    %1894 = vmatpush1.msra.mxu0 0.0
    %1895 = vmatprep.subr.mxu0 0.0
    %1896 = vmatpush1.msra.mxu0 0.0
    %1897 = vmatprep.subr.mxu0 0.0
    %1898 = vmatpush1.msra.mxu0 0.0
    %1899 = vmatprep.subr.mxu0 0.0
    %1900 = vmatpush1.msra.mxu0 0.0
    %1901 = vmatprep.subr.mxu0 0.0
    %1902 = vmatpush1.msra.mxu0 0.0
    %1903 = vmatprep.subr.mxu0 0.0
    %1904 = vmatpush1.msra.mxu0 0.0
    %1905 = vmatprep.subr.mxu0 0.0
    %1906 = vmatpush1.msra.mxu0 0.0
    %1907 = vmatprep.subr.mxu0 0.0
    %1908 = vmatpush1.msra.mxu0 0.0
    %1909 = vmatprep.subr.mxu0 0.0
    %1910 = vmatpush1.msra.mxu0 0.0
    %1911 = vmatprep.subr.mxu0 0.0
    %1912 = vmatpush1.msra.mxu0 0.0
    %1913 = vmatprep.subr.mxu0 0.0
    %1914 = vmatpush1.msra.mxu0 0.0
    %1915 = vmatprep.subr.mxu0 0.0
    %1916 = vmatpush1.msra.mxu0 0.0
    %1917 = vmatprep.subr.mxu0 0.0
    %1918 = vmatpush1.msra.mxu0 %v1884
    %1919 = vmatprep.subr.mxu0 0.0
    %1920 = vmatpush1.msra.mxu0 %v1883
    %1921 = vmatprep.subr.mxu0 0.0
    %1922 = vmatpush2.msra.mxu0 0.0
    %1923 = vmatprep.subr.mxu0 0.0
    %1924 = vmatpush2.msra.mxu0 0.0
    %1925 = vmatprep.subr.mxu0 0.0
    %1926 = vmatpush2.msra.mxu0 0.0
    %1927 = vmatprep.subr.mxu0 0.0
    %1928 = vmatpush2.msra.mxu0 0.0
    %1929 = vmatprep.subr.mxu0 0.0
    %1930 = vmatpush2.msra.mxu0 0.0
    %1931 = vmatprep.subr.mxu0 0.0
    %1932 = vmatpush2.msra.mxu0 0.0
    %1933 = vmatprep.subr.mxu0 0.0
    %1934 = vmatpush2.msra.mxu0 0.0
    %1935 = vmatprep.subr.mxu0 0.0
    %1936 = vmatpush2.msra.mxu0 0.0
    %1937 = vmatprep.subr.mxu0 0.0
    %1938 = vmatpush2.msra.mxu0 0.0
    %1939 = vmatprep.subr.mxu0 0.0
    %1940 = vmatpush2.msra.mxu0 0.0
    %1941 = vmatprep.subr.mxu0 0.0
    %1942 = vmatpush2.msra.mxu0 0.0
    %1943 = vmatprep.subr.mxu0 0.0
    %1944 = vmatpush2.msra.mxu0 0.0
    %1945 = vmatprep.subr.mxu0 0.0
    %1946 = vmatpush2.msra.mxu0 0.0
    %1947 = vmatprep.subr.mxu0 0.0
    %1948 = vmatpush2.msra.mxu0 0.0
    %1949 = vmatprep.subr.mxu0 0.0
    %1950 = vmatpush2.msra.mxu0 0.0
    %1951 = vmatprep.subr.mxu0 0.0
    %1952 = vmatpush2.msra.mxu0 0.0
    %1953 = vmatprep.mubr.f32.mxu0 0.0
    %1954 = vmatmul.mubr.f32.gmra.mxu0 %v1887
    %v1955 = vpop.f32.mrf.mxu0
    %v1956 = vadd.f32 0.0, %v1955
    %v1957 = vpop.f32.mrf.mxu0
    %1958 = vdwg.mxu0
    %v1959 = vlaneseq
    %v1960 = vshrl.u32 %v1959, 7
    %v1961 = vsub.s32 0, %v1960
    %v1962 = vrot.slane %v1572, %v1961
    %v1964 = vsel %vm381, %v1956, 0
    %1966 = vmatprep.subr.mxu0 0.0
    %1967 = vmatpush1.msra.mxu0 0.0
    %1968 = vmatprep.subr.mxu0 0.0
    %1969 = vmatpush1.msra.mxu0 0.0
    %1970 = vmatprep.subr.mxu0 0.0
    %1971 = vmatpush1.msra.mxu0 0.0
    %1972 = vmatprep.subr.mxu0 0.0
    %1973 = vmatpush1.msra.mxu0 0.0
    %1974 = vmatprep.subr.mxu0 0.0
    %1975 = vmatpush1.msra.mxu0 0.0
    %1976 = vmatprep.subr.mxu0 0.0
    %1977 = vmatpush1.msra.mxu0 0.0
    %1978 = vmatprep.subr.mxu0 0.0
    %1979 = vmatpush1.msra.mxu0 0.0
    %1980 = vmatprep.subr.mxu0 0.0
    %1981 = vmatpush1.msra.mxu0 0.0
    %1982 = vmatprep.subr.mxu0 0.0
    %1983 = vmatpush1.msra.mxu0 %v1582
    %1984 = vmatprep.subr.mxu0 0.0
    %1985 = vmatpush1.msra.mxu0 %v1581
    %1986 = vmatprep.subr.mxu0 0.0
    %1987 = vmatpush1.msra.mxu0 %v1580
    %1988 = vmatprep.subr.mxu0 0.0
    %1989 = vmatpush1.msra.mxu0 %v1579
    %1990 = vmatprep.subr.mxu0 0.0
    %1991 = vmatpush1.msra.mxu0 %v1578
    %1992 = vmatprep.subr.mxu0 0.0
    %1993 = vmatpush1.msra.mxu0 %v1577
    %1994 = vmatprep.subr.mxu0 0.0
    %1995 = vmatpush1.msra.mxu0 %v1576
    %1996 = vmatprep.subr.mxu0 0.0
    %1997 = vmatpush1.msra.mxu0 %v1575
    %1998 = vmatprep.subr.mxu0 0.0
    %1999 = vmatpush2.msra.mxu0 0.0
    %2000 = vmatprep.subr.mxu0 0.0
    %2001 = vmatpush2.msra.mxu0 0.0
    %2002 = vmatprep.subr.mxu0 0.0
    %2003 = vmatpush2.msra.mxu0 0.0
    %2004 = vmatprep.subr.mxu0 0.0
    %2005 = vmatpush2.msra.mxu0 0.0
    %2006 = vmatprep.subr.mxu0 0.0
    %2007 = vmatpush2.msra.mxu0 0.0
    %2008 = vmatprep.subr.mxu0 0.0
    %2009 = vmatpush2.msra.mxu0 0.0
    %2010 = vmatprep.subr.mxu0 0.0
    %2011 = vmatpush2.msra.mxu0 0.0
    %2012 = vmatprep.subr.mxu0 0.0
    %2013 = vmatpush2.msra.mxu0 0.0
    %2014 = vmatprep.subr.mxu0 0.0
    %2015 = vmatpush2.msra.mxu0 0.0
    %2016 = vmatprep.subr.mxu0 0.0
    %2017 = vmatpush2.msra.mxu0 0.0
    %2018 = vmatprep.subr.mxu0 0.0
    %2019 = vmatpush2.msra.mxu0 0.0
    %2020 = vmatprep.subr.mxu0 0.0
    %2021 = vmatpush2.msra.mxu0 0.0
    %2022 = vmatprep.subr.mxu0 0.0
    %2023 = vmatpush2.msra.mxu0 0.0
    %2024 = vmatprep.subr.mxu0 0.0
    %2025 = vmatpush2.msra.mxu0 0.0
    %2026 = vmatprep.subr.mxu0 0.0
    %2027 = vmatpush2.msra.mxu0 0.0
    %2028 = vmatprep.subr.mxu0 0.0
    %2029 = vmatpush2.msra.mxu0 0.0
    %2030 = vmatprep.mubr.f32.mxu0 0.0
    %2031 = vmatmul.mubr.f32.gmra.mxu0 %v1964
    %v2032 = vpop.f32.mrf.mxu0
    %v2033 = vadd.f32 %v1962, %v2032
    %v2034 = vpop.f32.mrf.mxu0
    %2035 = vdwg.mxu0
    %v2036 = vlaneseq
    %v2037 = vshrl.u32 %v2036, 7
    %v2038 = vsub.s32 0, %v2037
    %v2039 = vrot.slane %v1573, %v2038
    %v2040 = vmul.f32 %v2033, %v2039
    %v2041 = vlaneseq
    %v2042 = vshrl.u32 %v2041, 7
    %v2043 = vsub.s32 0, %v2042
    %v2044 = vrot.slane %v1574, %v2043
    %v2045 = vadd.f32 %v2040, %v2044
    %v2046 = vadd.f32 %v2045, %v1568
    %v2047 = vmax.f32 %v2046, 0.0
    %v2048 = vsel %vm381, %v2047, 0.0
    %2049 = vst [vmem:[#allocation11] sm:$0xf] %v2048
    // Predicated region
    $region62: #{gt_block_forward.1} parent=1 // pred_check
      _
    $region63: #{gt_block_forward.1} parent=1 // pred_check_branch
      %2051 = sbr.rel (0) target = $region65
    $region64: #{gt_block_forward.1} parent=1 // pred_region
      %s2053 = ssub.s32 64, 64
      %2054 = vsyncadd [#allocation4], %s2053
      %s2056 = sshll.u32 [#allocation11], 4
      %s2057 = int_to_ptr.vmem [resolvable:$true] %s2056
      %2059 = dma.vmem_to_hbm [thread:$0]  %s2057, 64, %s10, [#allocation4]
    $region65: #{gt_block_forward.1} parent=1 // pred_fallthru
      _
    // Predicated region
    $region66: #{gt_block_forward.1} parent=1 // pred_check
      _
    $region67: #{gt_block_forward.1} parent=1 // pred_check_branch
      %2061 = sbr.rel (0) target = $region69
    $region68: #{gt_block_forward.1} parent=1 // pred_region
      %2062 = dma.done [#allocation4], 64
    $region69: #{gt_block_forward.1} parent=1 // pred_fallthru
      _
    %2063 = vsyncpa [#allocation3], 1
    %2064 = vsyncpa [#allocation6], 1
    %2065 = vsyncpa [#allocation9], 1
    %2066 = vsyncpa [#allocation4], 1

</llo_original>
